<compile_context>
chip_gen: v6e
topology: v6e:2x2x1
jax: 0.10.0
libtpu: 0.0.40
codegen_flags: <defaults>
</compile_context>

<pallas_src>
import jax
import jax.numpy as jnp
import numpy as np
from jax.experimental import pallas as pl
from jax.experimental.pallas import tpu as pltpu

EPS = 1e-5


def _band_conv3x3_weight(w_hwio, W):
    """Pack a (3,3,C,Co) HWIO conv weight into a banded (3*W*C, W*Co) matrix.

    Row index = dy*W*C + w_in*C + c_in ; col index = w_out*Co + c_out ;
    entry = w[dy, dx, c_in, c_out] with dx = w_in - w_out + 1 (zero outside the
    3-tap band), which also encodes the zero padding at the w edges.
    """
    kh, kw, C, Co = w_hwio.shape
    blocks = []
    for dy in range(kh):
        blk = jnp.zeros((W * C, W * Co), jnp.float32)
        for dx in range(kw):
            sel = jnp.eye(W, k=1 - dx, dtype=jnp.float32)  # 1 iff w_in == w_out + dx - 1
            blk = blk + jnp.kron(sel, w_hwio[dy, dx])
        blocks.append(blk)
    return jnp.concatenate(blocks, axis=0)


def basic_up_block(x_nchw, params, stride=(2, 2)):
    """x_nchw: (N, C_in, H, W) float32. Returns (N, C_out, H*sh, W*sw) NCHW."""
    sh, sw = stride
    x = jnp.transpose(x_nchw, (0, 2, 3, 1)).astype(jnp.float32)      # NCHW -> NHWC
    N, H, W, C = x.shape
    c_out = params["wt4"].shape[-1]
    NH, WC = N * H, W * C
    up_cols = W * sh * sw * c_out

    # ---- wrapper-side packing (parameter-only / layout plumbing) ------------
    x_dense = x.reshape(NH, WC)                                       # lane-dense slab
    wb0 = _band_conv3x3_weight(params["w0"], W)                       # (3*WC, WC)
    wb1 = _band_conv3x3_weight(params["w1"], W)                       # (3*WC, WC)
    wup = jnp.kron(jnp.eye(W, dtype=jnp.float32),
                   params["wt4"].reshape(C, sh * sw * c_out))         # (WC, up_cols)
    red = jnp.tile(jnp.eye(C, dtype=jnp.float32), (W, 1))             # (WC, C)  per-channel reduce
    bcast = jnp.tile(jnp.eye(C, dtype=jnp.float32), (1, W))           # (C, WC)  per-channel broadcast

    inv_nhw = 1.0 / float(N * H * W)
    inv_hw = 1.0 / float(H * W)

    def kernel(x_ref, wb0_ref, wb1_ref, wup_ref,
               g0_ref, b0_ref, g1_ref, b1_ref, g2_ref, b2_ref,
               sw1_ref, sb1_ref, sw2_ref, sb2_ref,
               red_ref, bcast_ref, out_ref):

        def bn_relu(v, g_ref, b_ref):
            # BatchNorm2d (training mode): biased stats over (N,H,W) per channel,
            # var = E[x^2] - E[x]^2 (no (x - mean) pass). Per-channel reduce and
            # broadcast across the W lane groups go through small constant dots.
            s1 = jnp.dot(jnp.sum(v, axis=0, keepdims=True), red_ref[...],
                         preferred_element_type=jnp.float32)           # (1, C)
            s2 = jnp.dot(jnp.sum(v * v, axis=0, keepdims=True), red_ref[...],
                         preferred_element_type=jnp.float32)           # (1, C)
            mean = s1 * inv_nhw
            var = s2 * inv_nhw - mean * mean
            scale = g_ref[...] * jax.lax.rsqrt(var + EPS)              # (1, C)
            shift = b_ref[...] - mean * scale                          # (1, C)
            scale_row = jnp.dot(scale, bcast_ref[...],
                                preferred_element_type=jnp.float32)    # (1, WC)
            shift_row = jnp.dot(shift, bcast_ref[...],
                                preferred_element_type=jnp.float32)    # (1, WC)
            return jnp.maximum(v * scale_row + shift_row, 0.0)         # lane-dense ReLU

        def shift_rows(v, d):
            # T[n, h, :] = v[n, h + d, :] with zeros outside [0, H) (conv zero pad).
            v3 = v.reshape(N, H, WC)
            z = jnp.zeros((N, 1, WC), v.dtype)
            if d == -1:
                t = jnp.concatenate([z, v3[:, :H - 1, :]], axis=1)
            else:  # d == +1
                t = jnp.concatenate([v3[:, 1:, :], z], axis=1)
            return t.reshape(NH, WC)

        def conv3x3(v, wb_ref):
            # Fused "same" 3x3 conv: single (NH, 3*WC) @ (3*WC, WC) MXU matmul;
            # dx taps + w-edge padding are baked into the banded weight.
            patches = jnp.concatenate(
                [shift_rows(v, -1), v, shift_rows(v, +1)], axis=1)      # (NH, 3*WC)
            return jnp.dot(patches, wb_ref[...],
                           preferred_element_type=jnp.float32)          # (NH, WC)

        identity = x_ref[...]                                           # (NH, WC)
        h = bn_relu(identity, g0_ref, b0_ref)                           # norm0 + ReLU
        h = conv3x3(h, wb0_ref)                                         # conv0
        h = bn_relu(h, g1_ref, b1_ref)                                  # norm1 + ReLU
        h = conv3x3(h, wb1_ref)                                         # conv1

        # Squeeze-Excitation: global avg pool -> FC -> ReLU -> FC -> sigmoid -> scale
        pooled = jnp.dot(jnp.sum(h.reshape(N, H, WC), axis=1), red_ref[...],
                         preferred_element_type=jnp.float32) * inv_hw   # (N, C)
        z = jnp.maximum(
            jnp.dot(pooled, sw1_ref[...],
                    preferred_element_type=jnp.float32) + sb1_ref[...], 0.0)
        gate = jax.nn.sigmoid(
            jnp.dot(z, sw2_ref[...],
                    preferred_element_type=jnp.float32) + sb2_ref[...])  # (N, C)
        gate_row = jnp.dot(gate, bcast_ref[...],
                           preferred_element_type=jnp.float32)           # (N, WC)
        gate_dense = jnp.broadcast_to(
            gate_row[:, None, :], (N, H, WC)).reshape(NH, WC)
        h = h * gate_dense

        h = h + identity                                                 # residual add
        h = bn_relu(h, g2_ref, b2_ref)                                   # norm2 + ReLU

        # ConvTranspose2d (kernel == stride, non-overlapping): one matmul against a
        # block-diagonal weight -> lane-dense (NH, W*sh*sw*Cout) output (unmasked vst).
        out_ref[...] = jnp.dot(h, wup_ref[...], preferred_element_type=jnp.float32)

    inputs = (x_dense, wb0, wb1, wup,
              params["g0"], params["b0"], params["g1"], params["b1"],
              params["g2"], params["b2"],
              params["se_w1"], params["se_b1"], params["se_w2"], params["se_b2"],
              red, bcast)

    def full_spec(a):
        return pl.BlockSpec(a.shape, lambda i: (0,) * a.ndim)

    raw = pl.pallas_call(
        kernel,
        out_shape=jax.ShapeDtypeStruct((NH, up_cols), jnp.float32),
        grid=(1,),
        in_specs=[full_spec(a) for a in inputs],
        out_specs=pl.BlockSpec((NH, up_cols), lambda i: (0, 0)),
        compiler_params=pltpu.CompilerParams(
            dimension_semantics=("arbitrary",),
            vmem_limit_bytes=32 * 1024 * 1024),
    )(*inputs)

    # Wrapper-side layout plumbing: (NH, W*sh*sw*Co) -> (N, H*sh, W*sw, Co) -> NCHW.
    up = raw.reshape(N, H, W, sh, sw, c_out).transpose(0, 1, 3, 2, 4, 5)
    up = up.reshape(N, H * sh, W * sw, c_out)
    return jnp.transpose(up, (0, 3, 1, 2))


def init_params(key, c_in, c_out, stride, ratio):
    sh, sw = stride
    hidden = max(1, int(c_out * ratio))
    ks = jax.random.split(key, 12)
    f32 = jnp.float32
    return {
        # conv weights in HWIO (kh, kw, Cin, Cout)
        "w0": 0.1 * jax.random.normal(ks[0], (3, 3, c_in, c_in), f32),
        "w1": 0.1 * jax.random.normal(ks[1], (3, 3, c_in, c_in), f32),
        # transposed-conv weight as (Cin, kh, kw, Cout), kh=sh, kw=sw
        "wt4": 0.1 * jax.random.normal(ks[2], (c_in, sh, sw, c_out), f32),
        # BatchNorm affine params (gamma, beta) per norm layer
        "g0": 1.0 + 0.1 * jax.random.normal(ks[3], (1, c_in), f32),
        "b0": 0.1 * jax.random.normal(ks[4], (1, c_in), f32),
        "g1": 1.0 + 0.1 * jax.random.normal(ks[5], (1, c_in), f32),
        "b1": 0.1 * jax.random.normal(ks[6], (1, c_in), f32),
        "g2": 1.0 + 0.1 * jax.random.normal(ks[7], (1, c_in), f32),
        "b2": 0.1 * jax.random.normal(ks[8], (1, c_in), f32),
        # Squeeze-Excitation FCs
        "se_w1": 0.2 * jax.random.normal(ks[9], (c_out, hidden), f32),
        "se_b1": 0.05 * jax.random.normal(ks[10], (1, hidden), f32),
        "se_w2": 0.2 * jax.random.normal(ks[11], (hidden, c_out), f32),
        "se_b2": jnp.zeros((1, c_out), f32),
    }


def reference(x_nchw, p, stride):
    """Pure-JAX (XLA) reference of the same forward pass, for validation."""
    sh, sw = stride
    x = jnp.transpose(x_nchw, (0, 2, 3, 1)).astype(jnp.float32)

    def bn_relu(v, g, b):
        mean = jnp.mean(v, axis=(0, 1, 2), keepdims=True)
        var = jnp.mean((v - mean) ** 2, axis=(0, 1, 2), keepdims=True)
        return jnp.maximum((v - mean) * jax.lax.rsqrt(var + EPS) * g + b, 0.0)

    def conv3x3(v, w):
        return jax.lax.conv_general_dilated(
            v, w, (1, 1), ((1, 1), (1, 1)),
            dimension_numbers=("NHWC", "HWIO", "NHWC"),
            precision=jax.lax.Precision.HIGHEST)

    identity = x
    h = bn_relu(identity, p["g0"], p["b0"])
    h = conv3x3(h, p["w0"])
    h = bn_relu(h, p["g1"], p["b1"])
    h = conv3x3(h, p["w1"])
    pooled = jnp.mean(h, axis=(1, 2))
    z = jnp.maximum(pooled @ p["se_w1"] + p["se_b1"], 0.0)
    gate = jax.nn.sigmoid(z @ p["se_w2"] + p["se_b2"])
    h = h * gate[:, None, None, :]
    h = h + identity
    h = bn_relu(h, p["g2"], p["b2"])
    up = jnp.einsum("nhwc,cijo->nhiwjo", h, p["wt4"],
                    precision=jax.lax.Precision.HIGHEST)
    N, H, W, _ = h.shape
    c_out = p["wt4"].shape[-1]
    up = up.reshape(N, H * sh, W * sw, c_out)
    return jnp.transpose(up, (0, 3, 1, 2))


if __name__ == "__main__":
    key = jax.random.PRNGKey(0)
    N, C_IN, H, W = 2, 8, 16, 16
    C_OUT = 8                    # must equal C_IN (SE is applied to an in_channels tensor)
    STRIDE = (2, 2)
    RATIO = 0.25                 # -> SE hidden dim = 2

    k_x, k_p = jax.random.split(key)
    x = jax.random.normal(k_x, (N, C_IN, H, W), jnp.float32)   # NCHW, like PyTorch
    params = init_params(k_p, C_IN, C_OUT, STRIDE, RATIO)

    out = jax.block_until_ready(basic_up_block(x, params, STRIDE))
    ref = jax.block_until_ready(reference(x, params, STRIDE))

    assert out.shape == (N, C_OUT, H * STRIDE[0], W * STRIDE[1]), out.shape
    np.testing.assert_allclose(np.asarray(out), np.asarray(ref), rtol=2e-2, atol=2e-2)
    print("KERNEL_OK")
</pallas_src>

<mosaic_0001>
module attributes {stable_mosaic.version = 11 : i64} {
  func.func @kernel(%arg0: i32, %arg1: memref<32x128xf32, #tpu.memory_space<vmem>>, %arg2: memref<384x128xf32, #tpu.memory_space<vmem>>, %arg3: memref<384x128xf32, #tpu.memory_space<vmem>>, %arg4: memref<128x512xf32, #tpu.memory_space<vmem>>, %arg5: memref<1x8xf32, #tpu.memory_space<vmem>>, %arg6: memref<1x8xf32, #tpu.memory_space<vmem>>, %arg7: memref<1x8xf32, #tpu.memory_space<vmem>>, %arg8: memref<1x8xf32, #tpu.memory_space<vmem>>, %arg9: memref<1x8xf32, #tpu.memory_space<vmem>>, %arg10: memref<1x8xf32, #tpu.memory_space<vmem>>, %arg11: memref<8x2xf32, #tpu.memory_space<vmem>>, %arg12: memref<1x2xf32, #tpu.memory_space<vmem>>, %arg13: memref<2x8xf32, #tpu.memory_space<vmem>>, %arg14: memref<1x8xf32, #tpu.memory_space<vmem>>, %arg15: memref<128x8xf32, #tpu.memory_space<vmem>>, %arg16: memref<8x128xf32, #tpu.memory_space<vmem>>, %arg17: memref<32x512xf32, #tpu.memory_space<vmem>>) attributes {dimension_semantics = [#tpu.dimension_semantics<arbitrary>], iteration_bounds = array<i64: 1>, scalar_prefetch = 0 : i64, scratch_operands = 0 : i64, tpu.core_type = #tpu.core_type<tc>, window_params = [{pipeline_mode = #tpu.pipeline_mode<synchronous>, transform_indices = @transform_0, window_bounds = array<i64: 32, 128>}, {pipeline_mode = #tpu.pipeline_mode<synchronous>, transform_indices = @transform_1, window_bounds = array<i64: 384, 128>}, {pipeline_mode = #tpu.pipeline_mode<synchronous>, transform_indices = @transform_2, window_bounds = array<i64: 384, 128>}, {pipeline_mode = #tpu.pipeline_mode<synchronous>, transform_indices = @transform_3, window_bounds = array<i64: 128, 512>}, {pipeline_mode = #tpu.pipeline_mode<synchronous>, transform_indices = @transform_4, window_bounds = array<i64: 1, 8>}, {pipeline_mode = #tpu.pipeline_mode<synchronous>, transform_indices = @transform_5, window_bounds = array<i64: 1, 8>}, {pipeline_mode = #tpu.pipeline_mode<synchronous>, transform_indices = @transform_6, window_bounds = array<i64: 1, 8>}, {pipeline_mode = #tpu.pipeline_mode<synchronous>, transform_indices = @transform_7, window_bounds = array<i64: 1, 8>}, {pipeline_mode = #tpu.pipeline_mode<synchronous>, transform_indices = @transform_8, window_bounds = array<i64: 1, 8>}, {pipeline_mode = #tpu.pipeline_mode<synchronous>, transform_indices = @transform_9, window_bounds = array<i64: 1, 8>}, {pipeline_mode = #tpu.pipeline_mode<synchronous>, transform_indices = @transform_10, window_bounds = array<i64: 8, 2>}, {pipeline_mode = #tpu.pipeline_mode<synchronous>, transform_indices = @transform_11, window_bounds = array<i64: 1, 2>}, {pipeline_mode = #tpu.pipeline_mode<synchronous>, transform_indices = @transform_12, window_bounds = array<i64: 2, 8>}, {pipeline_mode = #tpu.pipeline_mode<synchronous>, transform_indices = @transform_13, window_bounds = array<i64: 1, 8>}, {pipeline_mode = #tpu.pipeline_mode<synchronous>, transform_indices = @transform_14, window_bounds = array<i64: 128, 8>}, {pipeline_mode = #tpu.pipeline_mode<synchronous>, transform_indices = @transform_15, window_bounds = array<i64: 8, 128>}, {pipeline_mode = #tpu.pipeline_mode<synchronous>, transform_indices = @transform_16, window_bounds = array<i64: 32, 512>}]} {
    %c0 = arith.constant 0 : index
    %c0_0 = arith.constant 0 : index
    %0 = vector.load %arg1[%c0, %c0_0] : memref<32x128xf32, #tpu.memory_space<vmem>>, vector<32x128xf32>
    %cst = arith.constant dense<0.000000e+00> : vector<128xf32>
    %1 = vector.multi_reduction <add>, %0, %cst [0] : vector<32x128xf32> to vector<128xf32>
    %2 = vector.shape_cast %1 : vector<128xf32> to vector<1x128xf32>
    %c0_1 = arith.constant 0 : index
    %c0_2 = arith.constant 0 : index
    %3 = vector.load %arg15[%c0_1, %c0_2] : memref<128x8xf32, #tpu.memory_space<vmem>>, vector<128x8xf32>
    %cst_3 = arith.constant dense<0.000000e+00> : vector<1x8xf32>
    %4 = tpu.matmul %2, %3, %cst_3 {dimension_numbers = #tpu.dot_dimension_numbers<[1], [0], [0], [1], [0, 0, 1, 1], [], []>} : vector<1x128xf32>, vector<128x8xf32>, vector<1x8xf32> -> vector<1x8xf32>
    %5 = arith.mulf %0, %0 : vector<32x128xf32>
    %cst_4 = arith.constant dense<0.000000e+00> : vector<128xf32>
    %6 = vector.multi_reduction <add>, %5, %cst_4 [0] : vector<32x128xf32> to vector<128xf32>
    %7 = vector.shape_cast %6 : vector<128xf32> to vector<1x128xf32>
    %c0_5 = arith.constant 0 : index
    %c0_6 = arith.constant 0 : index
    %8 = vector.load %arg15[%c0_5, %c0_6] : memref<128x8xf32, #tpu.memory_space<vmem>>, vector<128x8xf32>
    %cst_7 = arith.constant dense<0.000000e+00> : vector<1x8xf32>
    %9 = tpu.matmul %7, %8, %cst_7 {dimension_numbers = #tpu.dot_dimension_numbers<[1], [0], [0], [1], [0, 0, 1, 1], [], []>} : vector<1x128xf32>, vector<128x8xf32>, vector<1x8xf32> -> vector<1x8xf32>
    %cst_8 = arith.constant 0.001953125 : f32
    %10 = vector.broadcast %cst_8 : f32 to vector<1x8xf32>
    %11 = arith.mulf %4, %10 : vector<1x8xf32>
    %cst_9 = arith.constant 0.001953125 : f32
    %12 = vector.broadcast %cst_9 : f32 to vector<1x8xf32>
    %13 = arith.mulf %9, %12 : vector<1x8xf32>
    %14 = arith.mulf %11, %11 : vector<1x8xf32>
    %15 = arith.subf %13, %14 : vector<1x8xf32>
    %c0_10 = arith.constant 0 : index
    %c0_11 = arith.constant 0 : index
    %16 = vector.load %arg5[%c0_10, %c0_11] : memref<1x8xf32, #tpu.memory_space<vmem>>, vector<1x8xf32>
    %cst_12 = arith.constant 9.99999974E-6 : f32
    %17 = vector.broadcast %cst_12 : f32 to vector<1x8xf32>
    %18 = arith.addf %15, %17 : vector<1x8xf32>
    %19 = math.rsqrt %18 : vector<1x8xf32>
    %20 = arith.mulf %16, %19 : vector<1x8xf32>
    %c0_13 = arith.constant 0 : index
    %c0_14 = arith.constant 0 : index
    %21 = vector.load %arg6[%c0_13, %c0_14] : memref<1x8xf32, #tpu.memory_space<vmem>>, vector<1x8xf32>
    %22 = arith.mulf %11, %20 : vector<1x8xf32>
    %23 = arith.subf %21, %22 : vector<1x8xf32>
    %c0_15 = arith.constant 0 : index
    %c0_16 = arith.constant 0 : index
    %24 = vector.load %arg16[%c0_15, %c0_16] : memref<8x128xf32, #tpu.memory_space<vmem>>, vector<8x128xf32>
    %cst_17 = arith.constant dense<0.000000e+00> : vector<1x128xf32>
    %25 = tpu.matmul %20, %24, %cst_17 {dimension_numbers = #tpu.dot_dimension_numbers<[1], [0], [0], [1], [0, 0, 1, 1], [], []>} : vector<1x8xf32>, vector<8x128xf32>, vector<1x128xf32> -> vector<1x128xf32>
    %c0_18 = arith.constant 0 : index
    %c0_19 = arith.constant 0 : index
    %26 = vector.load %arg16[%c0_18, %c0_19] : memref<8x128xf32, #tpu.memory_space<vmem>>, vector<8x128xf32>
    %cst_20 = arith.constant dense<0.000000e+00> : vector<1x128xf32>
    %27 = tpu.matmul %23, %26, %cst_20 {dimension_numbers = #tpu.dot_dimension_numbers<[1], [0], [0], [1], [0, 0, 1, 1], [], []>} : vector<1x8xf32>, vector<8x128xf32>, vector<1x128xf32> -> vector<1x128xf32>
    %28 = vector.broadcast %25 : vector<1x128xf32> to vector<32x128xf32>
    %29 = arith.mulf %0, %28 : vector<32x128xf32>
    %30 = vector.broadcast %27 : vector<1x128xf32> to vector<32x128xf32>
    %31 = arith.addf %29, %30 : vector<32x128xf32>
    %cst_21 = arith.constant 0.000000e+00 : f32
    %32 = vector.broadcast %cst_21 : f32 to vector<32x128xf32>
    %33 = arith.maximumf %31, %32 : vector<32x128xf32>
    %34 = vector.shape_cast %33 : vector<32x128xf32> to vector<2x16x128xf32>
    %cst_22 = arith.constant 0.000000e+00 : f32
    %35 = vector.broadcast %cst_22 : f32 to vector<2x1x128xf32>
    %36 = vector.extract_strided_slice %34 {offsets = [0, 0, 0], sizes = [2, 15, 128], strides = [1, 1, 1]} : vector<2x16x128xf32> to vector<2x15x128xf32>
    %37 = tpu.concatenate %35, %36 in 1 : vector<2x1x128xf32>, vector<2x15x128xf32> -> vector<2x16x128xf32>
    %38 = vector.shape_cast %37 : vector<2x16x128xf32> to vector<32x128xf32>
    %39 = vector.shape_cast %33 : vector<32x128xf32> to vector<2x16x128xf32>
    %cst_23 = arith.constant 0.000000e+00 : f32
    %40 = vector.broadcast %cst_23 : f32 to vector<2x1x128xf32>
    %41 = vector.extract_strided_slice %39 {offsets = [0, 1, 0], sizes = [2, 15, 128], strides = [1, 1, 1]} : vector<2x16x128xf32> to vector<2x15x128xf32>
    %42 = tpu.concatenate %41, %40 in 1 : vector<2x15x128xf32>, vector<2x1x128xf32> -> vector<2x16x128xf32>
    %43 = vector.shape_cast %42 : vector<2x16x128xf32> to vector<32x128xf32>
    %44 = tpu.concatenate %38, %33, %43 in 1 : vector<32x128xf32>, vector<32x128xf32>, vector<32x128xf32> -> vector<32x384xf32>
    %c0_24 = arith.constant 0 : index
    %c0_25 = arith.constant 0 : index
    %45 = vector.load %arg2[%c0_24, %c0_25] : memref<384x128xf32, #tpu.memory_space<vmem>>, vector<384x128xf32>
    %cst_26 = arith.constant dense<0.000000e+00> : vector<32x128xf32>
    %46 = tpu.matmul %44, %45, %cst_26 {dimension_numbers = #tpu.dot_dimension_numbers<[1], [0], [0], [1], [0, 0, 1, 1], [], []>} : vector<32x384xf32>, vector<384x128xf32>, vector<32x128xf32> -> vector<32x128xf32>
    %cst_27 = arith.constant dense<0.000000e+00> : vector<128xf32>
    %47 = vector.multi_reduction <add>, %46, %cst_27 [0] : vector<32x128xf32> to vector<128xf32>
    %48 = vector.shape_cast %47 : vector<128xf32> to vector<1x128xf32>
    %c0_28 = arith.constant 0 : index
    %c0_29 = arith.constant 0 : index
    %49 = vector.load %arg15[%c0_28, %c0_29] : memref<128x8xf32, #tpu.memory_space<vmem>>, vector<128x8xf32>
    %cst_30 = arith.constant dense<0.000000e+00> : vector<1x8xf32>
    %50 = tpu.matmul %48, %49, %cst_30 {dimension_numbers = #tpu.dot_dimension_numbers<[1], [0], [0], [1], [0, 0, 1, 1], [], []>} : vector<1x128xf32>, vector<128x8xf32>, vector<1x8xf32> -> vector<1x8xf32>
    %51 = arith.mulf %46, %46 : vector<32x128xf32>
    %cst_31 = arith.constant dense<0.000000e+00> : vector<128xf32>
    %52 = vector.multi_reduction <add>, %51, %cst_31 [0] : vector<32x128xf32> to vector<128xf32>
    %53 = vector.shape_cast %52 : vector<128xf32> to vector<1x128xf32>
    %c0_32 = arith.constant 0 : index
    %c0_33 = arith.constant 0 : index
    %54 = vector.load %arg15[%c0_32, %c0_33] : memref<128x8xf32, #tpu.memory_space<vmem>>, vector<128x8xf32>
    %cst_34 = arith.constant dense<0.000000e+00> : vector<1x8xf32>
    %55 = tpu.matmul %53, %54, %cst_34 {dimension_numbers = #tpu.dot_dimension_numbers<[1], [0], [0], [1], [0, 0, 1, 1], [], []>} : vector<1x128xf32>, vector<128x8xf32>, vector<1x8xf32> -> vector<1x8xf32>
    %cst_35 = arith.constant 0.001953125 : f32
    %56 = vector.broadcast %cst_35 : f32 to vector<1x8xf32>
    %57 = arith.mulf %50, %56 : vector<1x8xf32>
    %cst_36 = arith.constant 0.001953125 : f32
    %58 = vector.broadcast %cst_36 : f32 to vector<1x8xf32>
    %59 = arith.mulf %55, %58 : vector<1x8xf32>
    %60 = arith.mulf %57, %57 : vector<1x8xf32>
    %61 = arith.subf %59, %60 : vector<1x8xf32>
    %c0_37 = arith.constant 0 : index
    %c0_38 = arith.constant 0 : index
    %62 = vector.load %arg7[%c0_37, %c0_38] : memref<1x8xf32, #tpu.memory_space<vmem>>, vector<1x8xf32>
    %cst_39 = arith.constant 9.99999974E-6 : f32
    %63 = vector.broadcast %cst_39 : f32 to vector<1x8xf32>
    %64 = arith.addf %61, %63 : vector<1x8xf32>
    %65 = math.rsqrt %64 : vector<1x8xf32>
    %66 = arith.mulf %62, %65 : vector<1x8xf32>
    %c0_40 = arith.constant 0 : index
    %c0_41 = arith.constant 0 : index
    %67 = vector.load %arg8[%c0_40, %c0_41] : memref<1x8xf32, #tpu.memory_space<vmem>>, vector<1x8xf32>
    %68 = arith.mulf %57, %66 : vector<1x8xf32>
    %69 = arith.subf %67, %68 : vector<1x8xf32>
    %c0_42 = arith.constant 0 : index
    %c0_43 = arith.constant 0 : index
    %70 = vector.load %arg16[%c0_42, %c0_43] : memref<8x128xf32, #tpu.memory_space<vmem>>, vector<8x128xf32>
    %cst_44 = arith.constant dense<0.000000e+00> : vector<1x128xf32>
    %71 = tpu.matmul %66, %70, %cst_44 {dimension_numbers = #tpu.dot_dimension_numbers<[1], [0], [0], [1], [0, 0, 1, 1], [], []>} : vector<1x8xf32>, vector<8x128xf32>, vector<1x128xf32> -> vector<1x128xf32>
    %c0_45 = arith.constant 0 : index
    %c0_46 = arith.constant 0 : index
    %72 = vector.load %arg16[%c0_45, %c0_46] : memref<8x128xf32, #tpu.memory_space<vmem>>, vector<8x128xf32>
    %cst_47 = arith.constant dense<0.000000e+00> : vector<1x128xf32>
    %73 = tpu.matmul %69, %72, %cst_47 {dimension_numbers = #tpu.dot_dimension_numbers<[1], [0], [0], [1], [0, 0, 1, 1], [], []>} : vector<1x8xf32>, vector<8x128xf32>, vector<1x128xf32> -> vector<1x128xf32>
    %74 = vector.broadcast %71 : vector<1x128xf32> to vector<32x128xf32>
    %75 = arith.mulf %46, %74 : vector<32x128xf32>
    %76 = vector.broadcast %73 : vector<1x128xf32> to vector<32x128xf32>
    %77 = arith.addf %75, %76 : vector<32x128xf32>
    %cst_48 = arith.constant 0.000000e+00 : f32
    %78 = vector.broadcast %cst_48 : f32 to vector<32x128xf32>
    %79 = arith.maximumf %77, %78 : vector<32x128xf32>
    %80 = vector.shape_cast %79 : vector<32x128xf32> to vector<2x16x128xf32>
    %cst_49 = arith.constant 0.000000e+00 : f32
    %81 = vector.broadcast %cst_49 : f32 to vector<2x1x128xf32>
    %82 = vector.extract_strided_slice %80 {offsets = [0, 0, 0], sizes = [2, 15, 128], strides = [1, 1, 1]} : vector<2x16x128xf32> to vector<2x15x128xf32>
    %83 = tpu.concatenate %81, %82 in 1 : vector<2x1x128xf32>, vector<2x15x128xf32> -> vector<2x16x128xf32>
    %84 = vector.shape_cast %83 : vector<2x16x128xf32> to vector<32x128xf32>
    %85 = vector.shape_cast %79 : vector<32x128xf32> to vector<2x16x128xf32>
    %cst_50 = arith.constant 0.000000e+00 : f32
    %86 = vector.broadcast %cst_50 : f32 to vector<2x1x128xf32>
    %87 = vector.extract_strided_slice %85 {offsets = [0, 1, 0], sizes = [2, 15, 128], strides = [1, 1, 1]} : vector<2x16x128xf32> to vector<2x15x128xf32>
    %88 = tpu.concatenate %87, %86 in 1 : vector<2x15x128xf32>, vector<2x1x128xf32> -> vector<2x16x128xf32>
    %89 = vector.shape_cast %88 : vector<2x16x128xf32> to vector<32x128xf32>
    %90 = tpu.concatenate %84, %79, %89 in 1 : vector<32x128xf32>, vector<32x128xf32>, vector<32x128xf32> -> vector<32x384xf32>
    %c0_51 = arith.constant 0 : index
    %c0_52 = arith.constant 0 : index
    %91 = vector.load %arg3[%c0_51, %c0_52] : memref<384x128xf32, #tpu.memory_space<vmem>>, vector<384x128xf32>
    %cst_53 = arith.constant dense<0.000000e+00> : vector<32x128xf32>
    %92 = tpu.matmul %90, %91, %cst_53 {dimension_numbers = #tpu.dot_dimension_numbers<[1], [0], [0], [1], [0, 0, 1, 1], [], []>} : vector<32x384xf32>, vector<384x128xf32>, vector<32x128xf32> -> vector<32x128xf32>
    %93 = vector.shape_cast %92 : vector<32x128xf32> to vector<2x16x128xf32>
    %cst_54 = arith.constant dense<0.000000e+00> : vector<2x128xf32>
    %94 = vector.multi_reduction <add>, %93, %cst_54 [1] : vector<2x16x128xf32> to vector<2x128xf32>
    %c0_55 = arith.constant 0 : index
    %c0_56 = arith.constant 0 : index
    %95 = vector.load %arg15[%c0_55, %c0_56] : memref<128x8xf32, #tpu.memory_space<vmem>>, vector<128x8xf32>
    %cst_57 = arith.constant dense<0.000000e+00> : vector<2x8xf32>
    %96 = tpu.matmul %94, %95, %cst_57 {dimension_numbers = #tpu.dot_dimension_numbers<[1], [0], [0], [1], [0, 0, 1, 1], [], []>} : vector<2x128xf32>, vector<128x8xf32>, vector<2x8xf32> -> vector<2x8xf32>
    %cst_58 = arith.constant 3.906250e-03 : f32
    %97 = vector.broadcast %cst_58 : f32 to vector<2x8xf32>
    %98 = arith.mulf %96, %97 : vector<2x8xf32>
    %c0_59 = arith.constant 0 : index
    %c0_60 = arith.constant 0 : index
    %99 = vector.load %arg11[%c0_59, %c0_60] : memref<8x2xf32, #tpu.memory_space<vmem>>, vector<8x2xf32>
    %cst_61 = arith.constant dense<0.000000e+00> : vector<2x2xf32>
    %100 = tpu.matmul %98, %99, %cst_61 {dimension_numbers = #tpu.dot_dimension_numbers<[1], [0], [0], [1], [0, 0, 1, 1], [], []>} : vector<2x8xf32>, vector<8x2xf32>, vector<2x2xf32> -> vector<2x2xf32>
    %c0_62 = arith.constant 0 : index
    %c0_63 = arith.constant 0 : index
    %101 = vector.load %arg12[%c0_62, %c0_63] : memref<1x2xf32, #tpu.memory_space<vmem>>, vector<1x2xf32>
    %102 = vector.broadcast %101 : vector<1x2xf32> to vector<2x2xf32>
    %103 = arith.addf %100, %102 : vector<2x2xf32>
    %cst_64 = arith.constant 0.000000e+00 : f32
    %104 = vector.broadcast %cst_64 : f32 to vector<2x2xf32>
    %105 = arith.maximumf %103, %104 : vector<2x2xf32>
    %c0_65 = arith.constant 0 : index
    %c0_66 = arith.constant 0 : index
    %106 = vector.load %arg13[%c0_65, %c0_66] : memref<2x8xf32, #tpu.memory_space<vmem>>, vector<2x8xf32>
    %cst_67 = arith.constant dense<0.000000e+00> : vector<2x8xf32>
    %107 = tpu.matmul %105, %106, %cst_67 {dimension_numbers = #tpu.dot_dimension_numbers<[1], [0], [0], [1], [0, 0, 1, 1], [], []>} : vector<2x2xf32>, vector<2x8xf32>, vector<2x8xf32> -> vector<2x8xf32>
    %c0_68 = arith.constant 0 : index
    %c0_69 = arith.constant 0 : index
    %108 = vector.load %arg14[%c0_68, %c0_69] : memref<1x8xf32, #tpu.memory_space<vmem>>, vector<1x8xf32>
    %109 = vector.broadcast %108 : vector<1x8xf32> to vector<2x8xf32>
    %110 = arith.addf %107, %109 : vector<2x8xf32>
    %111 = arith.negf %110 : vector<2x8xf32>
    %112 = math.exp %111 : vector<2x8xf32>
    %cst_70 = arith.constant 1.000000e+00 : f32
    %113 = vector.broadcast %cst_70 : f32 to vector<2x8xf32>
    %114 = arith.addf %113, %112 : vector<2x8xf32>
    %115 = arith.divf %113, %114 : vector<2x8xf32>
    %c0_71 = arith.constant 0 : index
    %c0_72 = arith.constant 0 : index
    %116 = vector.load %arg16[%c0_71, %c0_72] : memref<8x128xf32, #tpu.memory_space<vmem>>, vector<8x128xf32>
    %cst_73 = arith.constant dense<0.000000e+00> : vector<2x128xf32>
    %117 = tpu.matmul %115, %116, %cst_73 {dimension_numbers = #tpu.dot_dimension_numbers<[1], [0], [0], [1], [0, 0, 1, 1], [], []>} : vector<2x8xf32>, vector<8x128xf32>, vector<2x128xf32> -> vector<2x128xf32>
    %118 = vector.shape_cast %117 : vector<2x128xf32> to vector<2x1x128xf32>
    %119 = vector.shape_cast %118 : vector<2x1x128xf32> to vector<2x1x128xf32>
    %120 = vector.broadcast %119 : vector<2x1x128xf32> to vector<2x16x128xf32>
    %121 = vector.shape_cast %120 : vector<2x16x128xf32> to vector<32x128xf32>
    %122 = arith.mulf %92, %121 : vector<32x128xf32>
    %123 = arith.addf %122, %0 : vector<32x128xf32>
    %cst_74 = arith.constant dense<0.000000e+00> : vector<128xf32>
    %124 = vector.multi_reduction <add>, %123, %cst_74 [0] : vector<32x128xf32> to vector<128xf32>
    %125 = vector.shape_cast %124 : vector<128xf32> to vector<1x128xf32>
    %c0_75 = arith.constant 0 : index
    %c0_76 = arith.constant 0 : index
    %126 = vector.load %arg15[%c0_75, %c0_76] : memref<128x8xf32, #tpu.memory_space<vmem>>, vector<128x8xf32>
    %cst_77 = arith.constant dense<0.000000e+00> : vector<1x8xf32>
    %127 = tpu.matmul %125, %126, %cst_77 {dimension_numbers = #tpu.dot_dimension_numbers<[1], [0], [0], [1], [0, 0, 1, 1], [], []>} : vector<1x128xf32>, vector<128x8xf32>, vector<1x8xf32> -> vector<1x8xf32>
    %128 = arith.mulf %123, %123 : vector<32x128xf32>
    %cst_78 = arith.constant dense<0.000000e+00> : vector<128xf32>
    %129 = vector.multi_reduction <add>, %128, %cst_78 [0] : vector<32x128xf32> to vector<128xf32>
    %130 = vector.shape_cast %129 : vector<128xf32> to vector<1x128xf32>
    %c0_79 = arith.constant 0 : index
    %c0_80 = arith.constant 0 : index
    %131 = vector.load %arg15[%c0_79, %c0_80] : memref<128x8xf32, #tpu.memory_space<vmem>>, vector<128x8xf32>
    %cst_81 = arith.constant dense<0.000000e+00> : vector<1x8xf32>
    %132 = tpu.matmul %130, %131, %cst_81 {dimension_numbers = #tpu.dot_dimension_numbers<[1], [0], [0], [1], [0, 0, 1, 1], [], []>} : vector<1x128xf32>, vector<128x8xf32>, vector<1x8xf32> -> vector<1x8xf32>
    %cst_82 = arith.constant 0.001953125 : f32
    %133 = vector.broadcast %cst_82 : f32 to vector<1x8xf32>
    %134 = arith.mulf %127, %133 : vector<1x8xf32>
    %cst_83 = arith.constant 0.001953125 : f32
    %135 = vector.broadcast %cst_83 : f32 to vector<1x8xf32>
    %136 = arith.mulf %132, %135 : vector<1x8xf32>
    %137 = arith.mulf %134, %134 : vector<1x8xf32>
    %138 = arith.subf %136, %137 : vector<1x8xf32>
    %c0_84 = arith.constant 0 : index
    %c0_85 = arith.constant 0 : index
    %139 = vector.load %arg9[%c0_84, %c0_85] : memref<1x8xf32, #tpu.memory_space<vmem>>, vector<1x8xf32>
    %cst_86 = arith.constant 9.99999974E-6 : f32
    %140 = vector.broadcast %cst_86 : f32 to vector<1x8xf32>
    %141 = arith.addf %138, %140 : vector<1x8xf32>
    %142 = math.rsqrt %141 : vector<1x8xf32>
    %143 = arith.mulf %139, %142 : vector<1x8xf32>
    %c0_87 = arith.constant 0 : index
    %c0_88 = arith.constant 0 : index
    %144 = vector.load %arg10[%c0_87, %c0_88] : memref<1x8xf32, #tpu.memory_space<vmem>>, vector<1x8xf32>
    %145 = arith.mulf %134, %143 : vector<1x8xf32>
    %146 = arith.subf %144, %145 : vector<1x8xf32>
    %c0_89 = arith.constant 0 : index
    %c0_90 = arith.constant 0 : index
    %147 = vector.load %arg16[%c0_89, %c0_90] : memref<8x128xf32, #tpu.memory_space<vmem>>, vector<8x128xf32>
    %cst_91 = arith.constant dense<0.000000e+00> : vector<1x128xf32>
    %148 = tpu.matmul %143, %147, %cst_91 {dimension_numbers = #tpu.dot_dimension_numbers<[1], [0], [0], [1], [0, 0, 1, 1], [], []>} : vector<1x8xf32>, vector<8x128xf32>, vector<1x128xf32> -> vector<1x128xf32>
    %c0_92 = arith.constant 0 : index
    %c0_93 = arith.constant 0 : index
    %149 = vector.load %arg16[%c0_92, %c0_93] : memref<8x128xf32, #tpu.memory_space<vmem>>, vector<8x128xf32>
    %cst_94 = arith.constant dense<0.000000e+00> : vector<1x128xf32>
    %150 = tpu.matmul %146, %149, %cst_94 {dimension_numbers = #tpu.dot_dimension_numbers<[1], [0], [0], [1], [0, 0, 1, 1], [], []>} : vector<1x8xf32>, vector<8x128xf32>, vector<1x128xf32> -> vector<1x128xf32>
    %151 = vector.broadcast %148 : vector<1x128xf32> to vector<32x128xf32>
    %152 = arith.mulf %123, %151 : vector<32x128xf32>
    %153 = vector.broadcast %150 : vector<1x128xf32> to vector<32x128xf32>
    %154 = arith.addf %152, %153 : vector<32x128xf32>
    %cst_95 = arith.constant 0.000000e+00 : f32
    %155 = vector.broadcast %cst_95 : f32 to vector<32x128xf32>
    %156 = arith.maximumf %154, %155 : vector<32x128xf32>
    %c0_96 = arith.constant 0 : index
    %c0_97 = arith.constant 0 : index
    %157 = vector.load %arg4[%c0_96, %c0_97] : memref<128x512xf32, #tpu.memory_space<vmem>>, vector<128x512xf32>
    %cst_98 = arith.constant dense<0.000000e+00> : vector<32x512xf32>
    %158 = tpu.matmul %156, %157, %cst_98 {dimension_numbers = #tpu.dot_dimension_numbers<[1], [0], [0], [1], [0, 0, 1, 1], [], []>} : vector<32x128xf32>, vector<128x512xf32>, vector<32x512xf32> -> vector<32x512xf32>
    %c0_99 = arith.constant 0 : index
    %c0_100 = arith.constant 0 : index
    %159 = vector.load %arg17[%c0_99, %c0_100] : memref<32x512xf32, #tpu.memory_space<vmem>>, vector<32x512xf32>
    tpu.vector_store %arg17[%c0_99, %c0_100], %158 {strides = array<i32>} : memref<32x512xf32, #tpu.memory_space<vmem>>, vector<32x512xf32>,
    return
  }
  func.func @transform_0(%arg0: i32) -> (i32, i32) {
    %c0_i32 = arith.constant 0 : i32
    %c0_i32_0 = arith.constant 0 : i32
    %c0_i32_1 = arith.constant 0 : i32
    return %c0_i32, %c0_i32_0 : i32, i32
  }
  func.func @transform_1(%arg0: i32) -> (i32, i32) {
    %c0_i32 = arith.constant 0 : i32
    %c0_i32_0 = arith.constant 0 : i32
    %c0_i32_1 = arith.constant 0 : i32
    return %c0_i32, %c0_i32_0 : i32, i32
  }
  func.func @transform_2(%arg0: i32) -> (i32, i32) {
    %c0_i32 = arith.constant 0 : i32
    %c0_i32_0 = arith.constant 0 : i32
    %c0_i32_1 = arith.constant 0 : i32
    return %c0_i32, %c0_i32_0 : i32, i32
  }
  func.func @transform_3(%arg0: i32) -> (i32, i32) {
    %c0_i32 = arith.constant 0 : i32
    %c0_i32_0 = arith.constant 0 : i32
    %c0_i32_1 = arith.constant 0 : i32
    return %c0_i32, %c0_i32_0 : i32, i32
  }
  func.func @transform_4(%arg0: i32) -> (i32, i32) {
    %c0_i32 = arith.constant 0 : i32
    %c0_i32_0 = arith.constant 0 : i32
    %c0_i32_1 = arith.constant 0 : i32
    return %c0_i32, %c0_i32_0 : i32, i32
  }
  func.func @transform_5(%arg0: i32) -> (i32, i32) {
    %c0_i32 = arith.constant 0 : i32
    %c0_i32_0 = arith.constant 0 : i32
    %c0_i32_1 = arith.constant 0 : i32
    return %c0_i32, %c0_i32_0 : i32, i32
  }
  func.func @transform_6(%arg0: i32) -> (i32, i32) {
    %c0_i32 = arith.constant 0 : i32
    %c0_i32_0 = arith.constant 0 : i32
    %c0_i32_1 = arith.constant 0 : i32
    return %c0_i32, %c0_i32_0 : i32, i32
  }
  func.func @transform_7(%arg0: i32) -> (i32, i32) {
    %c0_i32 = arith.constant 0 : i32
    %c0_i32_0 = arith.constant 0 : i32
    %c0_i32_1 = arith.constant 0 : i32
    return %c0_i32, %c0_i32_0 : i32, i32
  }
  func.func @transform_8(%arg0: i32) -> (i32, i32) {
    %c0_i32 = arith.constant 0 : i32
    %c0_i32_0 = arith.constant 0 : i32
    %c0_i32_1 = arith.constant 0 : i32
    return %c0_i32, %c0_i32_0 : i32, i32
  }
  func.func @transform_9(%arg0: i32) -> (i32, i32) {
    %c0_i32 = arith.constant 0 : i32
    %c0_i32_0 = arith.constant 0 : i32
    %c0_i32_1 = arith.constant 0 : i32
    return %c0_i32, %c0_i32_0 : i32, i32
  }
  func.func @transform_10(%arg0: i32) -> (i32, i32) {
    %c0_i32 = arith.constant 0 : i32
    %c0_i32_0 = arith.constant 0 : i32
    %c0_i32_1 = arith.constant 0 : i32
    return %c0_i32, %c0_i32_0 : i32, i32
  }
  func.func @transform_11(%arg0: i32) -> (i32, i32) {
    %c0_i32 = arith.constant 0 : i32
    %c0_i32_0 = arith.constant 0 : i32
    %c0_i32_1 = arith.constant 0 : i32
    return %c0_i32, %c0_i32_0 : i32, i32
  }
  func.func @transform_12(%arg0: i32) -> (i32, i32) {
    %c0_i32 = arith.constant 0 : i32
    %c0_i32_0 = arith.constant 0 : i32
    %c0_i32_1 = arith.constant 0 : i32
    return %c0_i32, %c0_i32_0 : i32, i32
  }
  func.func @transform_13(%arg0: i32) -> (i32, i32) {
    %c0_i32 = arith.constant 0 : i32
    %c0_i32_0 = arith.constant 0 : i32
    %c0_i32_1 = arith.constant 0 : i32
    return %c0_i32, %c0_i32_0 : i32, i32
  }
  func.func @transform_14(%arg0: i32) -> (i32, i32) {
    %c0_i32 = arith.constant 0 : i32
    %c0_i32_0 = arith.constant 0 : i32
    %c0_i32_1 = arith.constant 0 : i32
    return %c0_i32, %c0_i32_0 : i32, i32
  }
  func.func @transform_15(%arg0: i32) -> (i32, i32) {
    %c0_i32 = arith.constant 0 : i32
    %c0_i32_0 = arith.constant 0 : i32
    %c0_i32_1 = arith.constant 0 : i32
    return %c0_i32, %c0_i32_0 : i32, i32
  }
  func.func @transform_16(%arg0: i32) -> (i32, i32) {
    %c0_i32 = arith.constant 0 : i32
    %c0_i32_0 = arith.constant 0 : i32
    %c0_i32_1 = arith.constant 0 : i32
    return %c0_i32, %c0_i32_0 : i32, i32
  }
}

</mosaic_0001>

<llo_original>
// kernel: tpu_custom_call.1
$region0: #{tpu_custom_call.1}
  #allocation0 [shape = 'u32[]', space=smem, size = 0x4, offset = 0x4, fixed_abs, tag = 'smem constant byte address 0x4 - core index']
  #allocation1 [shape = 'u32[144,128]{1,0:T(1,128)}', space=vmem, size = 0x12000, scoped, tag = 'internal scratch']
  %s0 = inlined_call_operand.vmem [shape: f32[32,128], index: 0, kind: input, shape index: {}]
  %s1 = inlined_call_operand.hbm [shape: f32[384,128], index: 1, kind: input, shape index: {}]
  %s2 = inlined_call_operand.hbm [shape: f32[384,128], index: 2, kind: input, shape index: {}]
  %s3 = inlined_call_operand.hbm [shape: f32[128,512], index: 3, kind: input, shape index: {}]
  %s4 = inlined_call_operand.vmem [shape: f32[1,8], index: 4, kind: input, shape index: {}]
  %s5 = inlined_call_operand.vmem [shape: f32[1,8], index: 5, kind: input, shape index: {}]
  %s6 = inlined_call_operand.vmem [shape: f32[1,8], index: 6, kind: input, shape index: {}]
  %s7 = inlined_call_operand.vmem [shape: f32[1,8], index: 7, kind: input, shape index: {}]
  %s8 = inlined_call_operand.vmem [shape: f32[1,8], index: 8, kind: input, shape index: {}]
  %s9 = inlined_call_operand.vmem [shape: f32[1,8], index: 9, kind: input, shape index: {}]
  %s10 = inlined_call_operand.vmem [shape: f32[8,2], index: 10, kind: input, shape index: {}]
  %s11 = inlined_call_operand.vmem [shape: f32[1,2], index: 11, kind: input, shape index: {}]
  %s12 = inlined_call_operand.vmem [shape: f32[2,8], index: 12, kind: input, shape index: {}]
  %s13 = inlined_call_operand.vmem [shape: f32[1,8], index: 13, kind: input, shape index: {}]
  %s14 = inlined_call_operand.vmem [shape: f32[128,8], index: 14, kind: input, shape index: {}]
  %s15 = inlined_call_operand.vmem [shape: f32[8,128], index: 15, kind: input, shape index: {}]
  %s16 = inlined_call_operand.hbm [shape: f32[32,512], index: 16, kind: output, shape index: {}]
  %s17 = sld [smem:[#allocation0]]
  $region86: #{tpu_custom_call.1} parent=0
    _
  %s19 = ssub.s32 1, %s17
  %s20 = scalar_select 0, %s19, %s17
  $region1: #{tpu_custom_call.1} parent=0
    #allocation2 [shape = 'u8[196608]{0}', space=vmem, size = 0x30000, scoped, tag = 'input window, operand 1, single buffered']
    #allocation3 [shape = 's32[1]{0}', space=sflag, size = 0x4, scoped, tag = 'scoped memory for tpu_custom_call.1']
    #allocation4 [shape = 's32[1]{0}', space=sflag, size = 0x4, scoped, tag = 'scoped memory for tpu_custom_call.1']
    #allocation5 [shape = 'u8[196608]{0}', space=vmem, size = 0x30000, scoped, tag = 'input window, operand 2, single buffered']
    #allocation6 [shape = 's32[1]{0}', space=sflag, size = 0x4, scoped, tag = 'scoped memory for tpu_custom_call.1']
    #allocation7 [shape = 'u8[262144]{0}', space=vmem, size = 0x40000, scoped, tag = 'input window, operand 3, single buffered']
    #allocation8 [shape = 'u8[65536]{0}', space=vmem, size = 0x10000, scoped, tag = 'output window, operand 0, single buffered']
    %21 = vsyncpa [#allocation3], 0
    %22 = vsyncpa [#allocation6], 0
    %23 = vsyncpa [#allocation4], 0
    // Predicated region
    $region2: #{tpu_custom_call.1} parent=1 // pred_check
      _
    $region3: #{tpu_custom_call.1} parent=1 // pred_check_branch
      %25 = sbr.rel (0) target = $region5
    $region4: #{tpu_custom_call.1} parent=1 // pred_region
      _
    $region5: #{tpu_custom_call.1} parent=1 // pred_fallthru
      _
    // Predicated region
    $region6: #{tpu_custom_call.1} parent=1 // pred_check
      _
    $region7: #{tpu_custom_call.1} parent=1 // pred_check_branch
      %27 = sbr.rel (0) target = $region9
    $region8: #{tpu_custom_call.1} parent=1 // pred_region
      %s29 = ssub.s32 6144, 6144
      %30 = vsyncadd [#allocation3], %s29
      %s31 = sshll.u32 [#allocation2], 4
      %s32 = int_to_ptr.vmem [resolvable:$true] %s31
      %37 = dma.hbm_to_vmem [thread:$0]  %s1, 6144, %s32, [#allocation3], 128, 128, 8
    $region9: #{tpu_custom_call.1} parent=1 // pred_fallthru
      _
    // Predicated region
    $region10: #{tpu_custom_call.1} parent=1 // pred_check
      _
    $region11: #{tpu_custom_call.1} parent=1 // pred_check_branch
      %39 = sbr.rel (0) target = $region13
    $region12: #{tpu_custom_call.1} parent=1 // pred_region
      %s41 = ssub.s32 6144, 6144
      %42 = vsyncadd [#allocation6], %s41
      %s43 = sshll.u32 [#allocation5], 4
      %s44 = int_to_ptr.vmem [resolvable:$true] %s43
      %49 = dma.hbm_to_vmem [thread:$0]  %s2, 6144, %s44, [#allocation6], 128, 128, 8
    $region13: #{tpu_custom_call.1} parent=1 // pred_fallthru
      _
    // Predicated region
    $region14: #{tpu_custom_call.1} parent=1 // pred_check
      _
    $region15: #{tpu_custom_call.1} parent=1 // pred_check_branch
      %51 = sbr.rel (0) target = $region17
    $region16: #{tpu_custom_call.1} parent=1 // pred_region
      %s53 = ssub.s32 8192, 8192
      %54 = vsyncadd [#allocation6], %s53
      %s55 = sshll.u32 [#allocation7], 4
      %s56 = int_to_ptr.vmem [resolvable:$true] %s55
      %61 = dma.hbm_to_vmem [thread:$0]  %s3, 8192, %s56, [#allocation6], 512, 512, 32
    $region17: #{tpu_custom_call.1} parent=1 // pred_fallthru
      _
    // Predicated region
    $region18: #{tpu_custom_call.1} parent=1 // pred_check
      _
    $region19: #{tpu_custom_call.1} parent=1 // pred_check_branch
      %63 = sbr.rel (0) target = $region21
    $region20: #{tpu_custom_call.1} parent=1 // pred_region
      _
    $region21: #{tpu_custom_call.1} parent=1 // pred_fallthru
      _
    // Predicated region
    $region22: #{tpu_custom_call.1} parent=1 // pred_check
      _
    $region23: #{tpu_custom_call.1} parent=1 // pred_check_branch
      %65 = sbr.rel (0) target = $region25
    $region24: #{tpu_custom_call.1} parent=1 // pred_region
      _
    $region25: #{tpu_custom_call.1} parent=1 // pred_fallthru
      _
    // Predicated region
    $region26: #{tpu_custom_call.1} parent=1 // pred_check
      _
    $region27: #{tpu_custom_call.1} parent=1 // pred_check_branch
      %67 = sbr.rel (0) target = $region29
    $region28: #{tpu_custom_call.1} parent=1 // pred_region
      _
    $region29: #{tpu_custom_call.1} parent=1 // pred_fallthru
      _
    // Predicated region
    $region30: #{tpu_custom_call.1} parent=1 // pred_check
      _
    $region31: #{tpu_custom_call.1} parent=1 // pred_check_branch
      %69 = sbr.rel (0) target = $region33
    $region32: #{tpu_custom_call.1} parent=1 // pred_region
      _
    $region33: #{tpu_custom_call.1} parent=1 // pred_fallthru
      _
    // Predicated region
    $region34: #{tpu_custom_call.1} parent=1 // pred_check
      _
    $region35: #{tpu_custom_call.1} parent=1 // pred_check_branch
      %71 = sbr.rel (0) target = $region37
    $region36: #{tpu_custom_call.1} parent=1 // pred_region
      _
    $region37: #{tpu_custom_call.1} parent=1 // pred_fallthru
      _
    // Predicated region
    $region38: #{tpu_custom_call.1} parent=1 // pred_check
      _
    $region39: #{tpu_custom_call.1} parent=1 // pred_check_branch
      %73 = sbr.rel (0) target = $region41
    $region40: #{tpu_custom_call.1} parent=1 // pred_region
      _
    $region41: #{tpu_custom_call.1} parent=1 // pred_fallthru
      _
    // Predicated region
    $region42: #{tpu_custom_call.1} parent=1 // pred_check
      _
    $region43: #{tpu_custom_call.1} parent=1 // pred_check_branch
      %75 = sbr.rel (0) target = $region45
    $region44: #{tpu_custom_call.1} parent=1 // pred_region
      _
    $region45: #{tpu_custom_call.1} parent=1 // pred_fallthru
      _
    // Predicated region
    $region46: #{tpu_custom_call.1} parent=1 // pred_check
      _
    $region47: #{tpu_custom_call.1} parent=1 // pred_check_branch
      %77 = sbr.rel (0) target = $region49
    $region48: #{tpu_custom_call.1} parent=1 // pred_region
      _
    $region49: #{tpu_custom_call.1} parent=1 // pred_fallthru
      _
    // Predicated region
    $region50: #{tpu_custom_call.1} parent=1 // pred_check
      _
    $region51: #{tpu_custom_call.1} parent=1 // pred_check_branch
      %79 = sbr.rel (0) target = $region53
    $region52: #{tpu_custom_call.1} parent=1 // pred_region
      _
    $region53: #{tpu_custom_call.1} parent=1 // pred_fallthru
      _
    // Predicated region
    $region54: #{tpu_custom_call.1} parent=1 // pred_check
      _
    $region55: #{tpu_custom_call.1} parent=1 // pred_check_branch
      %81 = sbr.rel (0) target = $region57
    $region56: #{tpu_custom_call.1} parent=1 // pred_region
      _
    $region57: #{tpu_custom_call.1} parent=1 // pred_fallthru
      _
    // Predicated region
    $region58: #{tpu_custom_call.1} parent=1 // pred_check
      _
    $region59: #{tpu_custom_call.1} parent=1 // pred_check_branch
      %83 = sbr.rel (0) target = $region61
    $region60: #{tpu_custom_call.1} parent=1 // pred_region
      _
    $region61: #{tpu_custom_call.1} parent=1 // pred_fallthru
      _
    // Predicated region
    $region62: #{tpu_custom_call.1} parent=1 // pred_check
      _
    $region63: #{tpu_custom_call.1} parent=1 // pred_check_branch
      %85 = sbr.rel (0) target = $region65
    $region64: #{tpu_custom_call.1} parent=1 // pred_region
      _
    $region65: #{tpu_custom_call.1} parent=1 // pred_fallthru
      _
    // Predicated region
    $region66: #{tpu_custom_call.1} parent=1 // pred_check
      _
    $region67: #{tpu_custom_call.1} parent=1 // pred_check_branch
      %87 = sbr.rel (0) target = $region69
    $region68: #{tpu_custom_call.1} parent=1 // pred_region
      %88 = dma.done [#allocation3], 6144
    $region69: #{tpu_custom_call.1} parent=1 // pred_fallthru
      _
    // Predicated region
    $region70: #{tpu_custom_call.1} parent=1 // pred_check
      _
    $region71: #{tpu_custom_call.1} parent=1 // pred_check_branch
      %90 = sbr.rel (0) target = $region73
    $region72: #{tpu_custom_call.1} parent=1 // pred_region
      %91 = dma.done [#allocation6], 6144
    $region73: #{tpu_custom_call.1} parent=1 // pred_fallthru
      _
    // Predicated region
    $region74: #{tpu_custom_call.1} parent=1 // pred_check
      _
    $region75: #{tpu_custom_call.1} parent=1 // pred_check_branch
      %93 = sbr.rel (0) target = $region77
    $region76: #{tpu_custom_call.1} parent=1 // pred_region
      %94 = dma.done [#allocation6], 8192
    $region77: #{tpu_custom_call.1} parent=1 // pred_fallthru
      _
    %v95 = vld [vmem:[%s0] sm:$0xff]
    %v96 = vld [vmem:[%s0 + $0x8] sm:$0xff]
    %v97 = vld [vmem:[%s0 + $0x10] sm:$0xff]
    %v98 = vld [vmem:[%s0 + $0x18] sm:$0xff]
    %v99 = vadd.f32 %v95, %v96
    %v100 = vadd.f32 %v99, %v97
    %v101 = vadd.f32 %v100, %v98
    %v102 = vrot.slane %v101, 4
    %v103 = vadd.f32 %v101, %v102
    %v104 = vrot.slane %v103, 2
    %v105 = vadd.f32 %v103, %v104
    %v106 = vrot.slane %v105, 1
    %v107 = vadd.f32 %v105, %v106
    %v108 = vld [vmem:[%s14] sm:$0xff]
    %v109 = vld [vmem:[%s14 + $0x8] sm:$0xff]
    %v110 = vld [vmem:[%s14 + $0x10] sm:$0xff]
    %v111 = vld [vmem:[%s14 + $0x18] sm:$0xff]
    %v112 = vld [vmem:[%s14 + $0x20] sm:$0xff]
    %v113 = vld [vmem:[%s14 + $0x28] sm:$0xff]
    %v114 = vld [vmem:[%s14 + $0x30] sm:$0xff]
    %v115 = vld [vmem:[%s14 + $0x38] sm:$0xff]
    %v116 = vld [vmem:[%s14 + $0x40] sm:$0xff]
    %v117 = vld [vmem:[%s14 + $0x48] sm:$0xff]
    %v118 = vld [vmem:[%s14 + $0x50] sm:$0xff]
    %v119 = vld [vmem:[%s14 + $0x58] sm:$0xff]
    %v120 = vld [vmem:[%s14 + $0x60] sm:$0xff]
    %v121 = vld [vmem:[%s14 + $0x68] sm:$0xff]
    %v122 = vld [vmem:[%s14 + $0x70] sm:$0xff]
    %v123 = vld [vmem:[%s14 + $0x78] sm:$0xff]
    %124 = vmatprep.subr.mxu0 0.0
    %125 = vmatpush1.msra.mxu0 %v123
    %126 = vmatprep.subr.mxu0 0.0
    %127 = vmatpush1.msra.mxu0 %v122
    %128 = vmatprep.subr.mxu0 0.0
    %129 = vmatpush1.msra.mxu0 %v121
    %130 = vmatprep.subr.mxu0 0.0
    %131 = vmatpush1.msra.mxu0 %v120
    %132 = vmatprep.subr.mxu0 0.0
    %133 = vmatpush1.msra.mxu0 %v119
    %134 = vmatprep.subr.mxu0 0.0
    %135 = vmatpush1.msra.mxu0 %v118
    %136 = vmatprep.subr.mxu0 0.0
    %137 = vmatpush1.msra.mxu0 %v117
    %138 = vmatprep.subr.mxu0 0.0
    %139 = vmatpush1.msra.mxu0 %v116
    %140 = vmatprep.subr.mxu0 0.0
    %141 = vmatpush1.msra.mxu0 %v115
    %142 = vmatprep.subr.mxu0 0.0
    %143 = vmatpush1.msra.mxu0 %v114
    %144 = vmatprep.subr.mxu0 0.0
    %145 = vmatpush1.msra.mxu0 %v113
    %146 = vmatprep.subr.mxu0 0.0
    %147 = vmatpush1.msra.mxu0 %v112
    %148 = vmatprep.subr.mxu0 0.0
    %149 = vmatpush1.msra.mxu0 %v111
    %150 = vmatprep.subr.mxu0 0.0
    %151 = vmatpush1.msra.mxu0 %v110
    %152 = vmatprep.subr.mxu0 0.0
    %153 = vmatpush1.msra.mxu0 %v109
    %154 = vmatprep.subr.mxu0 0.0
    %155 = vmatpush1.msra.mxu0 %v108
    %156 = vmatprep.subr.mxu0 0.0
    %157 = vmatpush2.msra.mxu0 0.0
    %158 = vmatprep.subr.mxu0 0.0
    %159 = vmatpush2.msra.mxu0 0.0
    %160 = vmatprep.subr.mxu0 0.0
    %161 = vmatpush2.msra.mxu0 0.0
    %162 = vmatprep.subr.mxu0 0.0
    %163 = vmatpush2.msra.mxu0 0.0
    %164 = vmatprep.subr.mxu0 0.0
    %165 = vmatpush2.msra.mxu0 0.0
    %166 = vmatprep.subr.mxu0 0.0
    %167 = vmatpush2.msra.mxu0 0.0
    %168 = vmatprep.subr.mxu0 0.0
    %169 = vmatpush2.msra.mxu0 0.0
    %170 = vmatprep.subr.mxu0 0.0
    %171 = vmatpush2.msra.mxu0 0.0
    %172 = vmatprep.subr.mxu0 0.0
    %173 = vmatpush2.msra.mxu0 0.0
    %174 = vmatprep.subr.mxu0 0.0
    %175 = vmatpush2.msra.mxu0 0.0
    %176 = vmatprep.subr.mxu0 0.0
    %177 = vmatpush2.msra.mxu0 0.0
    %178 = vmatprep.subr.mxu0 0.0
    %179 = vmatpush2.msra.mxu0 0.0
    %180 = vmatprep.subr.mxu0 0.0
    %181 = vmatpush2.msra.mxu0 0.0
    %182 = vmatprep.subr.mxu0 0.0
    %183 = vmatpush2.msra.mxu0 0.0
    %184 = vmatprep.subr.mxu0 0.0
    %185 = vmatpush2.msra.mxu0 0.0
    %186 = vmatprep.subr.mxu0 0.0
    %187 = vmatpush2.msra.mxu0 0.0
    %188 = vmatprep.mubr.f32.mxu0 0.0
    %189 = vmatmul.mubr.f32.gmra.mxu0 %v107
    %v190 = vpop.f32.mrf.mxu0
    %v191 = vadd.f32 0.0, %v190
    %v192 = vpop.f32.mrf.mxu0
    %193 = vdwg.mxu0
    %v194 = vmul.f32 %v95, %v95
    %v195 = vmul.f32 %v96, %v96
    %v196 = vmul.f32 %v97, %v97
    %v197 = vmul.f32 %v98, %v98
    %v198 = vadd.f32 %v194, %v195
    %v199 = vadd.f32 %v198, %v196
    %v200 = vadd.f32 %v199, %v197
    %v201 = vrot.slane %v200, 4
    %v202 = vadd.f32 %v200, %v201
    %v203 = vrot.slane %v202, 2
    %v204 = vadd.f32 %v202, %v203
    %v205 = vrot.slane %v204, 1
    %v206 = vadd.f32 %v204, %v205
    %207 = vmatprep.subr.mxu0 0.0
    %208 = vmatpush1.msra.mxu0 %v123
    %209 = vmatprep.subr.mxu0 0.0
    %210 = vmatpush1.msra.mxu0 %v122
    %211 = vmatprep.subr.mxu0 0.0
    %212 = vmatpush1.msra.mxu0 %v121
    %213 = vmatprep.subr.mxu0 0.0
    %214 = vmatpush1.msra.mxu0 %v120
    %215 = vmatprep.subr.mxu0 0.0
    %216 = vmatpush1.msra.mxu0 %v119
    %217 = vmatprep.subr.mxu0 0.0
    %218 = vmatpush1.msra.mxu0 %v118
    %219 = vmatprep.subr.mxu0 0.0
    %220 = vmatpush1.msra.mxu0 %v117
    %221 = vmatprep.subr.mxu0 0.0
    %222 = vmatpush1.msra.mxu0 %v116
    %223 = vmatprep.subr.mxu0 0.0
    %224 = vmatpush1.msra.mxu0 %v115
    %225 = vmatprep.subr.mxu0 0.0
    %226 = vmatpush1.msra.mxu0 %v114
    %227 = vmatprep.subr.mxu0 0.0
    %228 = vmatpush1.msra.mxu0 %v113
    %229 = vmatprep.subr.mxu0 0.0
    %230 = vmatpush1.msra.mxu0 %v112
    %231 = vmatprep.subr.mxu0 0.0
    %232 = vmatpush1.msra.mxu0 %v111
    %233 = vmatprep.subr.mxu0 0.0
    %234 = vmatpush1.msra.mxu0 %v110
    %235 = vmatprep.subr.mxu0 0.0
    %236 = vmatpush1.msra.mxu0 %v109
    %237 = vmatprep.subr.mxu0 0.0
    %238 = vmatpush1.msra.mxu0 %v108
    %239 = vmatprep.subr.mxu0 0.0
    %240 = vmatpush2.msra.mxu0 0.0
    %241 = vmatprep.subr.mxu0 0.0
    %242 = vmatpush2.msra.mxu0 0.0
    %243 = vmatprep.subr.mxu0 0.0
    %244 = vmatpush2.msra.mxu0 0.0
    %245 = vmatprep.subr.mxu0 0.0
    %246 = vmatpush2.msra.mxu0 0.0
    %247 = vmatprep.subr.mxu0 0.0
    %248 = vmatpush2.msra.mxu0 0.0
    %249 = vmatprep.subr.mxu0 0.0
    %250 = vmatpush2.msra.mxu0 0.0
    %251 = vmatprep.subr.mxu0 0.0
    %252 = vmatpush2.msra.mxu0 0.0
    %253 = vmatprep.subr.mxu0 0.0
    %254 = vmatpush2.msra.mxu0 0.0
    %255 = vmatprep.subr.mxu0 0.0
    %256 = vmatpush2.msra.mxu0 0.0
    %257 = vmatprep.subr.mxu0 0.0
    %258 = vmatpush2.msra.mxu0 0.0
    %259 = vmatprep.subr.mxu0 0.0
    %260 = vmatpush2.msra.mxu0 0.0
    %261 = vmatprep.subr.mxu0 0.0
    %262 = vmatpush2.msra.mxu0 0.0
    %263 = vmatprep.subr.mxu0 0.0
    %264 = vmatpush2.msra.mxu0 0.0
    %265 = vmatprep.subr.mxu0 0.0
    %266 = vmatpush2.msra.mxu0 0.0
    %267 = vmatprep.subr.mxu0 0.0
    %268 = vmatpush2.msra.mxu0 0.0
    %269 = vmatprep.subr.mxu0 0.0
    %270 = vmatpush2.msra.mxu0 0.0
    %271 = vmatprep.mubr.f32.mxu0 0.0
    %272 = vmatmul.mubr.f32.gmra.mxu0 %v206
    %v273 = vpop.f32.mrf.mxu0
    %v274 = vadd.f32 0.0, %v273
    %v275 = vpop.f32.mrf.mxu0
    %276 = vdwg.mxu0
    %v277 = vmul.f32 %v191, 0.001953125
    %v278 = vmul.f32 %v274, 0.001953125
    %v279 = vmul.f32 %v277, %v277
    %v280 = vsub.f32 %v278, %v279
    %v281 = vld [vmem:[%s4] sm:$0x1]
    %v282 = vadd.f32 %v280, 1e-05
    %v283 = vrsqrt.pop %v282
    %v284 = vmul.f32 %v281, %v283
    %v285 = vld [vmem:[%s5] sm:$0x1]
    %v286 = vmul.f32 %v277, %v284
    %v287 = vsub.f32 %v285, %v286
    %v288 = vld [vmem:[%s15] sm:$0xff]
    %vm289 = vcmask 64512
    %v291 = vsel %vm289, %v284, 0
    %293 = vmatprep.subr.mxu0 0.0
    %294 = vmatpush1.msra.mxu0 0.0
    %295 = vmatprep.subr.mxu0 0.0
    %296 = vmatpush1.msra.mxu0 0.0
    %297 = vmatprep.subr.mxu0 0.0
    %298 = vmatpush1.msra.mxu0 0.0
    %299 = vmatprep.subr.mxu0 0.0
    %300 = vmatpush1.msra.mxu0 0.0
    %301 = vmatprep.subr.mxu0 0.0
    %302 = vmatpush1.msra.mxu0 0.0
    %303 = vmatprep.subr.mxu0 0.0
    %304 = vmatpush1.msra.mxu0 0.0
    %305 = vmatprep.subr.mxu0 0.0
    %306 = vmatpush1.msra.mxu0 0.0
    %307 = vmatprep.subr.mxu0 0.0
    %308 = vmatpush1.msra.mxu0 0.0
    %309 = vmatprep.subr.mxu0 0.0
    %310 = vmatpush1.msra.mxu0 0.0
    %311 = vmatprep.subr.mxu0 0.0
    %312 = vmatpush1.msra.mxu0 0.0
    %313 = vmatprep.subr.mxu0 0.0
    %314 = vmatpush1.msra.mxu0 0.0
    %315 = vmatprep.subr.mxu0 0.0
    %316 = vmatpush1.msra.mxu0 0.0
    %317 = vmatprep.subr.mxu0 0.0
    %318 = vmatpush1.msra.mxu0 0.0
    %319 = vmatprep.subr.mxu0 0.0
    %320 = vmatpush1.msra.mxu0 0.0
    %321 = vmatprep.subr.mxu0 0.0
    %322 = vmatpush1.msra.mxu0 0.0
    %323 = vmatprep.subr.mxu0 0.0
    %324 = vmatpush1.msra.mxu0 %v288
    %325 = vmatprep.subr.mxu0 0.0
    %326 = vmatpush2.msra.mxu0 0.0
    %327 = vmatprep.subr.mxu0 0.0
    %328 = vmatpush2.msra.mxu0 0.0
    %329 = vmatprep.subr.mxu0 0.0
    %330 = vmatpush2.msra.mxu0 0.0
    %331 = vmatprep.subr.mxu0 0.0
    %332 = vmatpush2.msra.mxu0 0.0
    %333 = vmatprep.subr.mxu0 0.0
    %334 = vmatpush2.msra.mxu0 0.0
    %335 = vmatprep.subr.mxu0 0.0
    %336 = vmatpush2.msra.mxu0 0.0
    %337 = vmatprep.subr.mxu0 0.0
    %338 = vmatpush2.msra.mxu0 0.0
    %339 = vmatprep.subr.mxu0 0.0
    %340 = vmatpush2.msra.mxu0 0.0
    %341 = vmatprep.subr.mxu0 0.0
    %342 = vmatpush2.msra.mxu0 0.0
    %343 = vmatprep.subr.mxu0 0.0
    %344 = vmatpush2.msra.mxu0 0.0
    %345 = vmatprep.subr.mxu0 0.0
    %346 = vmatpush2.msra.mxu0 0.0
    %347 = vmatprep.subr.mxu0 0.0
    %348 = vmatpush2.msra.mxu0 0.0
    %349 = vmatprep.subr.mxu0 0.0
    %350 = vmatpush2.msra.mxu0 0.0
    %351 = vmatprep.subr.mxu0 0.0
    %352 = vmatpush2.msra.mxu0 0.0
    %353 = vmatprep.subr.mxu0 0.0
    %354 = vmatpush2.msra.mxu0 0.0
    %355 = vmatprep.subr.mxu0 0.0
    %356 = vmatpush2.msra.mxu0 0.0
    %357 = vmatprep.mubr.f32.mxu0 0.0
    %358 = vmatmul.mubr.f32.gmra.mxu0 %v291
    %v359 = vpop.f32.mrf.mxu0
    %v360 = vadd.f32 0.0, %v359
    %v361 = vpop.f32.mrf.mxu0
    %362 = vdwg.mxu0
    %v364 = vsel %vm289, %v287, 0
    %366 = vmatprep.subr.mxu0 0.0
    %367 = vmatpush1.msra.mxu0 0.0
    %368 = vmatprep.subr.mxu0 0.0
    %369 = vmatpush1.msra.mxu0 0.0
    %370 = vmatprep.subr.mxu0 0.0
    %371 = vmatpush1.msra.mxu0 0.0
    %372 = vmatprep.subr.mxu0 0.0
    %373 = vmatpush1.msra.mxu0 0.0
    %374 = vmatprep.subr.mxu0 0.0
    %375 = vmatpush1.msra.mxu0 0.0
    %376 = vmatprep.subr.mxu0 0.0
    %377 = vmatpush1.msra.mxu0 0.0
    %378 = vmatprep.subr.mxu0 0.0
    %379 = vmatpush1.msra.mxu0 0.0
    %380 = vmatprep.subr.mxu0 0.0
    %381 = vmatpush1.msra.mxu0 0.0
    %382 = vmatprep.subr.mxu0 0.0
    %383 = vmatpush1.msra.mxu0 0.0
    %384 = vmatprep.subr.mxu0 0.0
    %385 = vmatpush1.msra.mxu0 0.0
    %386 = vmatprep.subr.mxu0 0.0
    %387 = vmatpush1.msra.mxu0 0.0
    %388 = vmatprep.subr.mxu0 0.0
    %389 = vmatpush1.msra.mxu0 0.0
    %390 = vmatprep.subr.mxu0 0.0
    %391 = vmatpush1.msra.mxu0 0.0
    %392 = vmatprep.subr.mxu0 0.0
    %393 = vmatpush1.msra.mxu0 0.0
    %394 = vmatprep.subr.mxu0 0.0
    %395 = vmatpush1.msra.mxu0 0.0
    %396 = vmatprep.subr.mxu0 0.0
    %397 = vmatpush1.msra.mxu0 %v288
    %398 = vmatprep.subr.mxu0 0.0
    %399 = vmatpush2.msra.mxu0 0.0
    %400 = vmatprep.subr.mxu0 0.0
    %401 = vmatpush2.msra.mxu0 0.0
    %402 = vmatprep.subr.mxu0 0.0
    %403 = vmatpush2.msra.mxu0 0.0
    %404 = vmatprep.subr.mxu0 0.0
    %405 = vmatpush2.msra.mxu0 0.0
    %406 = vmatprep.subr.mxu0 0.0
    %407 = vmatpush2.msra.mxu0 0.0
    %408 = vmatprep.subr.mxu0 0.0
    %409 = vmatpush2.msra.mxu0 0.0
    %410 = vmatprep.subr.mxu0 0.0
    %411 = vmatpush2.msra.mxu0 0.0
    %412 = vmatprep.subr.mxu0 0.0
    %413 = vmatpush2.msra.mxu0 0.0
    %414 = vmatprep.subr.mxu0 0.0
    %415 = vmatpush2.msra.mxu0 0.0
    %416 = vmatprep.subr.mxu0 0.0
    %417 = vmatpush2.msra.mxu0 0.0
    %418 = vmatprep.subr.mxu0 0.0
    %419 = vmatpush2.msra.mxu0 0.0
    %420 = vmatprep.subr.mxu0 0.0
    %421 = vmatpush2.msra.mxu0 0.0
    %422 = vmatprep.subr.mxu0 0.0
    %423 = vmatpush2.msra.mxu0 0.0
    %424 = vmatprep.subr.mxu0 0.0
    %425 = vmatpush2.msra.mxu0 0.0
    %426 = vmatprep.subr.mxu0 0.0
    %427 = vmatpush2.msra.mxu0 0.0
    %428 = vmatprep.subr.mxu0 0.0
    %429 = vmatpush2.msra.mxu0 0.0
    %430 = vmatprep.mubr.f32.mxu0 0.0
    %431 = vmatmul.mubr.f32.gmra.mxu0 %v364
    %v432 = vpop.f32.mrf.mxu0
    %v433 = vadd.f32 0.0, %v432
    %v434 = vpop.f32.mrf.mxu0
    %435 = vdwg.mxu0
    %v436 = vlaneseq
    %v437 = vshrl.u32 %v436, 7
    %v438 = vsub.s32 0, %v437
    %v439 = vrot.slane %v360, %v438
    %v440 = vmul.f32 %v95, %v439
    %v441 = vmul.f32 %v96, %v439
    %v442 = vmul.f32 %v97, %v439
    %v443 = vmul.f32 %v98, %v439
    %v444 = vlaneseq
    %v445 = vshrl.u32 %v444, 7
    %v446 = vsub.s32 0, %v445
    %v447 = vrot.slane %v433, %v446
    %v448 = vadd.f32 %v440, %v447
    %v449 = vadd.f32 %v441, %v447
    %v450 = vadd.f32 %v442, %v447
    %v451 = vadd.f32 %v443, %v447
    %v452 = vmax.f32 %v448, 0.0
    %v453 = vmax.f32 %v449, 0.0
    %v454 = vmax.f32 %v450, 0.0
    %v455 = vmax.f32 %v451, 0.0
    %vm460 = vcmask 1040384
    %v461 = vrot.slane %v452, 7
    %v462 = vrot.slane %v453, 7
    %v463 = vsel %vm460, %v461, %v462
    %v464 = vrot.slane %v454, 7
    %v465 = vrot.slane %v455, 7
    %v466 = vsel %vm460, %v464, %v465
    %v471 = vsel %vm460, 0.0, %v461
    %v472 = vsel %vm460, 0.0, %v464
    %vm473 = vcmask 1046528
    %v474 = vrot.slane %v452, 1
    %v475 = vrot.slane %v453, 1
    %v476 = vsel %vm473, %v474, %v475
    %v477 = vrot.slane %v454, 1
    %v478 = vrot.slane %v455, 1
    %v479 = vsel %vm473, %v477, %v478
    %v484 = vsel %vm473, %v475, 0.0
    %v485 = vsel %vm473, %v478, 0.0
    %v486 = vld [vmem:[#allocation2] sm:$0xff]
    %v487 = vld [vmem:[#allocation2 + $0x8] sm:$0xff]
    %v488 = vld [vmem:[#allocation2 + $0x10] sm:$0xff]
    %v489 = vld [vmem:[#allocation2 + $0x18] sm:$0xff]
    %v490 = vld [vmem:[#allocation2 + $0x20] sm:$0xff]
    %v491 = vld [vmem:[#allocation2 + $0x28] sm:$0xff]
    %v492 = vld [vmem:[#allocation2 + $0x30] sm:$0xff]
    %v493 = vld [vmem:[#allocation2 + $0x38] sm:$0xff]
    %v494 = vld [vmem:[#allocation2 + $0x40] sm:$0xff]
    %v495 = vld [vmem:[#allocation2 + $0x48] sm:$0xff]
    %v496 = vld [vmem:[#allocation2 + $0x50] sm:$0xff]
    %v497 = vld [vmem:[#allocation2 + $0x58] sm:$0xff]
    %v498 = vld [vmem:[#allocation2 + $0x60] sm:$0xff]
    %v499 = vld [vmem:[#allocation2 + $0x68] sm:$0xff]
    %v500 = vld [vmem:[#allocation2 + $0x70] sm:$0xff]
    %v501 = vld [vmem:[#allocation2 + $0x78] sm:$0xff]
    %v502 = vld [vmem:[#allocation2 + $0x80] sm:$0xff]
    %v503 = vld [vmem:[#allocation2 + $0x88] sm:$0xff]
    %v504 = vld [vmem:[#allocation2 + $0x90] sm:$0xff]
    %v505 = vld [vmem:[#allocation2 + $0x98] sm:$0xff]
    %v506 = vld [vmem:[#allocation2 + $0xa0] sm:$0xff]
    %v507 = vld [vmem:[#allocation2 + $0xa8] sm:$0xff]
    %v508 = vld [vmem:[#allocation2 + $0xb0] sm:$0xff]
    %v509 = vld [vmem:[#allocation2 + $0xb8] sm:$0xff]
    %v510 = vld [vmem:[#allocation2 + $0xc0] sm:$0xff]
    %v511 = vld [vmem:[#allocation2 + $0xc8] sm:$0xff]
    %v512 = vld [vmem:[#allocation2 + $0xd0] sm:$0xff]
    %v513 = vld [vmem:[#allocation2 + $0xd8] sm:$0xff]
    %v514 = vld [vmem:[#allocation2 + $0xe0] sm:$0xff]
    %v515 = vld [vmem:[#allocation2 + $0xe8] sm:$0xff]
    %v516 = vld [vmem:[#allocation2 + $0xf0] sm:$0xff]
    %v517 = vld [vmem:[#allocation2 + $0xf8] sm:$0xff]
    %v518 = vld [vmem:[#allocation2 + $0x100] sm:$0xff]
    %v519 = vld [vmem:[#allocation2 + $0x108] sm:$0xff]
    %v520 = vld [vmem:[#allocation2 + $0x110] sm:$0xff]
    %v521 = vld [vmem:[#allocation2 + $0x118] sm:$0xff]
    %v522 = vld [vmem:[#allocation2 + $0x120] sm:$0xff]
    %v523 = vld [vmem:[#allocation2 + $0x128] sm:$0xff]
    %v524 = vld [vmem:[#allocation2 + $0x130] sm:$0xff]
    %v525 = vld [vmem:[#allocation2 + $0x138] sm:$0xff]
    %v526 = vld [vmem:[#allocation2 + $0x140] sm:$0xff]
    %v527 = vld [vmem:[#allocation2 + $0x148] sm:$0xff]
    %v528 = vld [vmem:[#allocation2 + $0x150] sm:$0xff]
    %v529 = vld [vmem:[#allocation2 + $0x158] sm:$0xff]
    %v530 = vld [vmem:[#allocation2 + $0x160] sm:$0xff]
    %v531 = vld [vmem:[#allocation2 + $0x168] sm:$0xff]
    %v532 = vld [vmem:[#allocation2 + $0x170] sm:$0xff]
    %v533 = vld [vmem:[#allocation2 + $0x178] sm:$0xff]
    %534 = vmatprep.subr.mxu0 0.0
    %535 = vmatpush1.msra.mxu0 %v501
    %536 = vmatprep.subr.mxu0 0.0
    %537 = vmatpush1.msra.mxu0 %v500
    %538 = vmatprep.subr.mxu0 0.0
    %539 = vmatpush1.msra.mxu0 %v499
    %540 = vmatprep.subr.mxu0 0.0
    %541 = vmatpush1.msra.mxu0 %v498
    %542 = vmatprep.subr.mxu0 0.0
    %543 = vmatpush1.msra.mxu0 %v497
    %544 = vmatprep.subr.mxu0 0.0
    %545 = vmatpush1.msra.mxu0 %v496
    %546 = vmatprep.subr.mxu0 0.0
    %547 = vmatpush1.msra.mxu0 %v495
    %548 = vmatprep.subr.mxu0 0.0
    %549 = vmatpush1.msra.mxu0 %v494
    %550 = vmatprep.subr.mxu0 0.0
    %551 = vmatpush1.msra.mxu0 %v493
    %552 = vmatprep.subr.mxu0 0.0
    %553 = vmatpush1.msra.mxu0 %v492
    %554 = vmatprep.subr.mxu0 0.0
    %555 = vmatpush1.msra.mxu0 %v491
    %556 = vmatprep.subr.mxu0 0.0
    %557 = vmatpush1.msra.mxu0 %v490
    %558 = vmatprep.subr.mxu0 0.0
    %559 = vmatpush1.msra.mxu0 %v489
    %560 = vmatprep.subr.mxu0 0.0
    %561 = vmatpush1.msra.mxu0 %v488
    %562 = vmatprep.subr.mxu0 0.0
    %563 = vmatpush1.msra.mxu0 %v487
    %564 = vmatprep.subr.mxu0 0.0
    %565 = vmatpush1.msra.mxu0 %v486
    %566 = vmatprep.subr.mxu0 0.0
    %567 = vmatpush2.msra.mxu0 %v517
    %568 = vmatprep.subr.mxu0 0.0
    %569 = vmatpush2.msra.mxu0 %v516
    %570 = vmatprep.subr.mxu0 0.0
    %571 = vmatpush2.msra.mxu0 %v515
    %572 = vmatprep.subr.mxu0 0.0
    %573 = vmatpush2.msra.mxu0 %v514
    %574 = vmatprep.subr.mxu0 0.0
    %575 = vmatpush2.msra.mxu0 %v513
    %576 = vmatprep.subr.mxu0 0.0
    %577 = vmatpush2.msra.mxu0 %v512
    %578 = vmatprep.subr.mxu0 0.0
    %579 = vmatpush2.msra.mxu0 %v511
    %580 = vmatprep.subr.mxu0 0.0
    %581 = vmatpush2.msra.mxu0 %v510
    %582 = vmatprep.subr.mxu0 0.0
    %583 = vmatpush2.msra.mxu0 %v509
    %584 = vmatprep.subr.mxu0 0.0
    %585 = vmatpush2.msra.mxu0 %v508
    %586 = vmatprep.subr.mxu0 0.0
    %587 = vmatpush2.msra.mxu0 %v507
    %588 = vmatprep.subr.mxu0 0.0
    %589 = vmatpush2.msra.mxu0 %v506
    %590 = vmatprep.subr.mxu0 0.0
    %591 = vmatpush2.msra.mxu0 %v505
    %592 = vmatprep.subr.mxu0 0.0
    %593 = vmatpush2.msra.mxu0 %v504
    %594 = vmatprep.subr.mxu0 0.0
    %595 = vmatpush2.msra.mxu0 %v503
    %596 = vmatprep.subr.mxu0 0.0
    %597 = vmatpush2.msra.mxu0 %v502
    %598 = vmatprep.mubr.f32.mxu0 %v452
    %599 = vmatmul.mubr.f32.gmra.mxu0 %v471
    %v600 = vpop.f32.mrf.mxu0
    %v601 = vadd.f32 0.0, %v600
    %v602 = vpop.f32.mrf.mxu0
    %603 = vmatprep.mubr.f32.mxu0 %v453
    %604 = vmatmul.mubr.f32.gmra.mxu0 %v463
    %v605 = vpop.f32.mrf.mxu0
    %v606 = vadd.f32 0.0, %v605
    %v607 = vpop.f32.mrf.mxu0
    %608 = vmatprep.mubr.f32.mxu0 %v454
    %609 = vmatmul.mubr.f32.gmra.mxu0 %v472
    %v610 = vpop.f32.mrf.mxu0
    %v611 = vadd.f32 0.0, %v610
    %v612 = vpop.f32.mrf.mxu0
    %613 = vmatprep.mubr.f32.mxu0 %v455
    %614 = vmatmul.mubr.f32.gmra.mxu0 %v466
    %v615 = vpop.f32.mrf.mxu0
    %v616 = vadd.f32 0.0, %v615
    %v617 = vpop.f32.mrf.mxu0
    %618 = vdwg.mxu0
    %619 = vmatprep.subr.mxu0 0.0
    %620 = vmatpush1.msra.mxu0 %v533
    %621 = vmatprep.subr.mxu0 0.0
    %622 = vmatpush1.msra.mxu0 %v532
    %623 = vmatprep.subr.mxu0 0.0
    %624 = vmatpush1.msra.mxu0 %v531
    %625 = vmatprep.subr.mxu0 0.0
    %626 = vmatpush1.msra.mxu0 %v530
    %627 = vmatprep.subr.mxu0 0.0
    %628 = vmatpush1.msra.mxu0 %v529
    %629 = vmatprep.subr.mxu0 0.0
    %630 = vmatpush1.msra.mxu0 %v528
    %631 = vmatprep.subr.mxu0 0.0
    %632 = vmatpush1.msra.mxu0 %v527
    %633 = vmatprep.subr.mxu0 0.0
    %634 = vmatpush1.msra.mxu0 %v526
    %635 = vmatprep.subr.mxu0 0.0
    %636 = vmatpush1.msra.mxu0 %v525
    %637 = vmatprep.subr.mxu0 0.0
    %638 = vmatpush1.msra.mxu0 %v524
    %639 = vmatprep.subr.mxu0 0.0
    %640 = vmatpush1.msra.mxu0 %v523
    %641 = vmatprep.subr.mxu0 0.0
    %642 = vmatpush1.msra.mxu0 %v522
    %643 = vmatprep.subr.mxu0 0.0
    %644 = vmatpush1.msra.mxu0 %v521
    %645 = vmatprep.subr.mxu0 0.0
    %646 = vmatpush1.msra.mxu0 %v520
    %647 = vmatprep.subr.mxu0 0.0
    %648 = vmatpush1.msra.mxu0 %v519
    %649 = vmatprep.subr.mxu0 0.0
    %650 = vmatpush1.msra.mxu0 %v518
    %651 = vmatprep.subr.mxu0 0.0
    %652 = vmatpush2.msra.mxu0 0.0
    %653 = vmatprep.subr.mxu0 0.0
    %654 = vmatpush2.msra.mxu0 0.0
    %655 = vmatprep.subr.mxu0 0.0
    %656 = vmatpush2.msra.mxu0 0.0
    %657 = vmatprep.subr.mxu0 0.0
    %658 = vmatpush2.msra.mxu0 0.0
    %659 = vmatprep.subr.mxu0 0.0
    %660 = vmatpush2.msra.mxu0 0.0
    %661 = vmatprep.subr.mxu0 0.0
    %662 = vmatpush2.msra.mxu0 0.0
    %663 = vmatprep.subr.mxu0 0.0
    %664 = vmatpush2.msra.mxu0 0.0
    %665 = vmatprep.subr.mxu0 0.0
    %666 = vmatpush2.msra.mxu0 0.0
    %667 = vmatprep.subr.mxu0 0.0
    %668 = vmatpush2.msra.mxu0 0.0
    %669 = vmatprep.subr.mxu0 0.0
    %670 = vmatpush2.msra.mxu0 0.0
    %671 = vmatprep.subr.mxu0 0.0
    %672 = vmatpush2.msra.mxu0 0.0
    %673 = vmatprep.subr.mxu0 0.0
    %674 = vmatpush2.msra.mxu0 0.0
    %675 = vmatprep.subr.mxu0 0.0
    %676 = vmatpush2.msra.mxu0 0.0
    %677 = vmatprep.subr.mxu0 0.0
    %678 = vmatpush2.msra.mxu0 0.0
    %679 = vmatprep.subr.mxu0 0.0
    %680 = vmatpush2.msra.mxu0 0.0
    %681 = vmatprep.subr.mxu0 0.0
    %682 = vmatpush2.msra.mxu0 0.0
    %683 = vmatprep.mubr.f32.mxu0 0.0
    %684 = vmatmul.mubr.f32.gmra.mxu0 %v476
    %v685 = vpop.f32.mrf.mxu0
    %v686 = vadd.f32 %v601, %v685
    %v687 = vpop.f32.mrf.mxu0
    %688 = vmatprep.mubr.f32.mxu0 0.0
    %689 = vmatmul.mubr.f32.gmra.mxu0 %v484
    %v690 = vpop.f32.mrf.mxu0
    %v691 = vadd.f32 %v606, %v690
    %v692 = vpop.f32.mrf.mxu0
    %693 = vmatprep.mubr.f32.mxu0 0.0
    %694 = vmatmul.mubr.f32.gmra.mxu0 %v479
    %v695 = vpop.f32.mrf.mxu0
    %v696 = vadd.f32 %v611, %v695
    %v697 = vpop.f32.mrf.mxu0
    %698 = vmatprep.mubr.f32.mxu0 0.0
    %699 = vmatmul.mubr.f32.gmra.mxu0 %v485
    %v700 = vpop.f32.mrf.mxu0
    %v701 = vadd.f32 %v616, %v700
    %v702 = vpop.f32.mrf.mxu0
    %703 = vdwg.mxu0
    %v704 = vadd.f32 %v686, %v691
    %v705 = vadd.f32 %v704, %v696
    %v706 = vadd.f32 %v705, %v701
    %v707 = vrot.slane %v706, 4
    %v708 = vadd.f32 %v706, %v707
    %v709 = vrot.slane %v708, 2
    %v710 = vadd.f32 %v708, %v709
    %v711 = vrot.slane %v710, 1
    %v712 = vadd.f32 %v710, %v711
    %713 = vmatprep.subr.mxu0 0.0
    %714 = vmatpush1.msra.mxu0 %v123
    %715 = vmatprep.subr.mxu0 0.0
    %716 = vmatpush1.msra.mxu0 %v122
    %717 = vmatprep.subr.mxu0 0.0
    %718 = vmatpush1.msra.mxu0 %v121
    %719 = vmatprep.subr.mxu0 0.0
    %720 = vmatpush1.msra.mxu0 %v120
    %721 = vmatprep.subr.mxu0 0.0
    %722 = vmatpush1.msra.mxu0 %v119
    %723 = vmatprep.subr.mxu0 0.0
    %724 = vmatpush1.msra.mxu0 %v118
    %725 = vmatprep.subr.mxu0 0.0
    %726 = vmatpush1.msra.mxu0 %v117
    %727 = vmatprep.subr.mxu0 0.0
    %728 = vmatpush1.msra.mxu0 %v116
    %729 = vmatprep.subr.mxu0 0.0
    %730 = vmatpush1.msra.mxu0 %v115
    %731 = vmatprep.subr.mxu0 0.0
    %732 = vmatpush1.msra.mxu0 %v114
    %733 = vmatprep.subr.mxu0 0.0
    %734 = vmatpush1.msra.mxu0 %v113
    %735 = vmatprep.subr.mxu0 0.0
    %736 = vmatpush1.msra.mxu0 %v112
    %737 = vmatprep.subr.mxu0 0.0
    %738 = vmatpush1.msra.mxu0 %v111
    %739 = vmatprep.subr.mxu0 0.0
    %740 = vmatpush1.msra.mxu0 %v110
    %741 = vmatprep.subr.mxu0 0.0
    %742 = vmatpush1.msra.mxu0 %v109
    %743 = vmatprep.subr.mxu0 0.0
    %744 = vmatpush1.msra.mxu0 %v108
    %745 = vmatprep.subr.mxu0 0.0
    %746 = vmatpush2.msra.mxu0 0.0
    %747 = vmatprep.subr.mxu0 0.0
    %748 = vmatpush2.msra.mxu0 0.0
    %749 = vmatprep.subr.mxu0 0.0
    %750 = vmatpush2.msra.mxu0 0.0
    %751 = vmatprep.subr.mxu0 0.0
    %752 = vmatpush2.msra.mxu0 0.0
    %753 = vmatprep.subr.mxu0 0.0
    %754 = vmatpush2.msra.mxu0 0.0
    %755 = vmatprep.subr.mxu0 0.0
    %756 = vmatpush2.msra.mxu0 0.0
    %757 = vmatprep.subr.mxu0 0.0
    %758 = vmatpush2.msra.mxu0 0.0
    %759 = vmatprep.subr.mxu0 0.0
    %760 = vmatpush2.msra.mxu0 0.0
    %761 = vmatprep.subr.mxu0 0.0
    %762 = vmatpush2.msra.mxu0 0.0
    %763 = vmatprep.subr.mxu0 0.0
    %764 = vmatpush2.msra.mxu0 0.0
    %765 = vmatprep.subr.mxu0 0.0
    %766 = vmatpush2.msra.mxu0 0.0
    %767 = vmatprep.subr.mxu0 0.0
    %768 = vmatpush2.msra.mxu0 0.0
    %769 = vmatprep.subr.mxu0 0.0
    %770 = vmatpush2.msra.mxu0 0.0
    %771 = vmatprep.subr.mxu0 0.0
    %772 = vmatpush2.msra.mxu0 0.0
    %773 = vmatprep.subr.mxu0 0.0
    %774 = vmatpush2.msra.mxu0 0.0
    %775 = vmatprep.subr.mxu0 0.0
    %776 = vmatpush2.msra.mxu0 0.0
    %777 = vmatprep.mubr.f32.mxu0 0.0
    %778 = vmatmul.mubr.f32.gmra.mxu0 %v712
    %v779 = vpop.f32.mrf.mxu0
    %v780 = vadd.f32 0.0, %v779
    %v781 = vpop.f32.mrf.mxu0
    %782 = vdwg.mxu0
    %v783 = vmul.f32 %v686, %v686
    %v784 = vmul.f32 %v691, %v691
    %v785 = vmul.f32 %v696, %v696
    %v786 = vmul.f32 %v701, %v701
    %v787 = vadd.f32 %v783, %v784
    %v788 = vadd.f32 %v787, %v785
    %v789 = vadd.f32 %v788, %v786
    %v790 = vrot.slane %v789, 4
    %v791 = vadd.f32 %v789, %v790
    %v792 = vrot.slane %v791, 2
    %v793 = vadd.f32 %v791, %v792
    %v794 = vrot.slane %v793, 1
    %v795 = vadd.f32 %v793, %v794
    %796 = vmatprep.subr.mxu0 0.0
    %797 = vmatpush1.msra.mxu0 %v123
    %798 = vmatprep.subr.mxu0 0.0
    %799 = vmatpush1.msra.mxu0 %v122
    %800 = vmatprep.subr.mxu0 0.0
    %801 = vmatpush1.msra.mxu0 %v121
    %802 = vmatprep.subr.mxu0 0.0
    %803 = vmatpush1.msra.mxu0 %v120
    %804 = vmatprep.subr.mxu0 0.0
    %805 = vmatpush1.msra.mxu0 %v119
    %806 = vmatprep.subr.mxu0 0.0
    %807 = vmatpush1.msra.mxu0 %v118
    %808 = vmatprep.subr.mxu0 0.0
    %809 = vmatpush1.msra.mxu0 %v117
    %810 = vmatprep.subr.mxu0 0.0
    %811 = vmatpush1.msra.mxu0 %v116
    %812 = vmatprep.subr.mxu0 0.0
    %813 = vmatpush1.msra.mxu0 %v115
    %814 = vmatprep.subr.mxu0 0.0
    %815 = vmatpush1.msra.mxu0 %v114
    %816 = vmatprep.subr.mxu0 0.0
    %817 = vmatpush1.msra.mxu0 %v113
    %818 = vmatprep.subr.mxu0 0.0
    %819 = vmatpush1.msra.mxu0 %v112
    %820 = vmatprep.subr.mxu0 0.0
    %821 = vmatpush1.msra.mxu0 %v111
    %822 = vmatprep.subr.mxu0 0.0
    %823 = vmatpush1.msra.mxu0 %v110
    %824 = vmatprep.subr.mxu0 0.0
    %825 = vmatpush1.msra.mxu0 %v109
    %826 = vmatprep.subr.mxu0 0.0
    %827 = vmatpush1.msra.mxu0 %v108
    %828 = vmatprep.subr.mxu0 0.0
    %829 = vmatpush2.msra.mxu0 0.0
    %830 = vmatprep.subr.mxu0 0.0
    %831 = vmatpush2.msra.mxu0 0.0
    %832 = vmatprep.subr.mxu0 0.0
    %833 = vmatpush2.msra.mxu0 0.0
    %834 = vmatprep.subr.mxu0 0.0
    %835 = vmatpush2.msra.mxu0 0.0
    %836 = vmatprep.subr.mxu0 0.0
    %837 = vmatpush2.msra.mxu0 0.0
    %838 = vmatprep.subr.mxu0 0.0
    %839 = vmatpush2.msra.mxu0 0.0
    %840 = vmatprep.subr.mxu0 0.0
    %841 = vmatpush2.msra.mxu0 0.0
    %842 = vmatprep.subr.mxu0 0.0
    %843 = vmatpush2.msra.mxu0 0.0
    %844 = vmatprep.subr.mxu0 0.0
    %845 = vmatpush2.msra.mxu0 0.0
    %846 = vmatprep.subr.mxu0 0.0
    %847 = vmatpush2.msra.mxu0 0.0
    %848 = vmatprep.subr.mxu0 0.0
    %849 = vmatpush2.msra.mxu0 0.0
    %850 = vmatprep.subr.mxu0 0.0
    %851 = vmatpush2.msra.mxu0 0.0
    %852 = vmatprep.subr.mxu0 0.0
    %853 = vmatpush2.msra.mxu0 0.0
    %854 = vmatprep.subr.mxu0 0.0
    %855 = vmatpush2.msra.mxu0 0.0
    %856 = vmatprep.subr.mxu0 0.0
    %857 = vmatpush2.msra.mxu0 0.0
    %858 = vmatprep.subr.mxu0 0.0
    %859 = vmatpush2.msra.mxu0 0.0
    %860 = vmatprep.mubr.f32.mxu0 0.0
    %861 = vmatmul.mubr.f32.gmra.mxu0 %v795
    %v862 = vpop.f32.mrf.mxu0
    %v863 = vadd.f32 0.0, %v862
    %v864 = vpop.f32.mrf.mxu0
    %865 = vdwg.mxu0
    %v866 = vmul.f32 %v780, 0.001953125
    %v867 = vmul.f32 %v863, 0.001953125
    %v868 = vmul.f32 %v866, %v866
    %v869 = vsub.f32 %v867, %v868
    %v870 = vld [vmem:[%s6] sm:$0x1]
    %v871 = vadd.f32 %v869, 1e-05
    %v872 = vrsqrt.pop %v871
    %v873 = vmul.f32 %v870, %v872
    %v874 = vld [vmem:[%s7] sm:$0x1]
    %v875 = vmul.f32 %v866, %v873
    %v876 = vsub.f32 %v874, %v875
    %v878 = vsel %vm289, %v873, 0
    %880 = vmatprep.subr.mxu0 0.0
    %881 = vmatpush1.msra.mxu0 0.0
    %882 = vmatprep.subr.mxu0 0.0
    %883 = vmatpush1.msra.mxu0 0.0
    %884 = vmatprep.subr.mxu0 0.0
    %885 = vmatpush1.msra.mxu0 0.0
    %886 = vmatprep.subr.mxu0 0.0
    %887 = vmatpush1.msra.mxu0 0.0
    %888 = vmatprep.subr.mxu0 0.0
    %889 = vmatpush1.msra.mxu0 0.0
    %890 = vmatprep.subr.mxu0 0.0
    %891 = vmatpush1.msra.mxu0 0.0
    %892 = vmatprep.subr.mxu0 0.0
    %893 = vmatpush1.msra.mxu0 0.0
    %894 = vmatprep.subr.mxu0 0.0
    %895 = vmatpush1.msra.mxu0 0.0
    %896 = vmatprep.subr.mxu0 0.0
    %897 = vmatpush1.msra.mxu0 0.0
    %898 = vmatprep.subr.mxu0 0.0
    %899 = vmatpush1.msra.mxu0 0.0
    %900 = vmatprep.subr.mxu0 0.0
    %901 = vmatpush1.msra.mxu0 0.0
    %902 = vmatprep.subr.mxu0 0.0
    %903 = vmatpush1.msra.mxu0 0.0
    %904 = vmatprep.subr.mxu0 0.0
    %905 = vmatpush1.msra.mxu0 0.0
    %906 = vmatprep.subr.mxu0 0.0
    %907 = vmatpush1.msra.mxu0 0.0
    %908 = vmatprep.subr.mxu0 0.0
    %909 = vmatpush1.msra.mxu0 0.0
    %910 = vmatprep.subr.mxu0 0.0
    %911 = vmatpush1.msra.mxu0 %v288
    %912 = vmatprep.subr.mxu0 0.0
    %913 = vmatpush2.msra.mxu0 0.0
    %914 = vmatprep.subr.mxu0 0.0
    %915 = vmatpush2.msra.mxu0 0.0
    %916 = vmatprep.subr.mxu0 0.0
    %917 = vmatpush2.msra.mxu0 0.0
    %918 = vmatprep.subr.mxu0 0.0
    %919 = vmatpush2.msra.mxu0 0.0
    %920 = vmatprep.subr.mxu0 0.0
    %921 = vmatpush2.msra.mxu0 0.0
    %922 = vmatprep.subr.mxu0 0.0
    %923 = vmatpush2.msra.mxu0 0.0
    %924 = vmatprep.subr.mxu0 0.0
    %925 = vmatpush2.msra.mxu0 0.0
    %926 = vmatprep.subr.mxu0 0.0
    %927 = vmatpush2.msra.mxu0 0.0
    %928 = vmatprep.subr.mxu0 0.0
    %929 = vmatpush2.msra.mxu0 0.0
    %930 = vmatprep.subr.mxu0 0.0
    %931 = vmatpush2.msra.mxu0 0.0
    %932 = vmatprep.subr.mxu0 0.0
    %933 = vmatpush2.msra.mxu0 0.0
    %934 = vmatprep.subr.mxu0 0.0
    %935 = vmatpush2.msra.mxu0 0.0
    %936 = vmatprep.subr.mxu0 0.0
    %937 = vmatpush2.msra.mxu0 0.0
    %938 = vmatprep.subr.mxu0 0.0
    %939 = vmatpush2.msra.mxu0 0.0
    %940 = vmatprep.subr.mxu0 0.0
    %941 = vmatpush2.msra.mxu0 0.0
    %942 = vmatprep.subr.mxu0 0.0
    %943 = vmatpush2.msra.mxu0 0.0
    %944 = vmatprep.mubr.f32.mxu0 0.0
    %945 = vmatmul.mubr.f32.gmra.mxu0 %v878
    %v946 = vpop.f32.mrf.mxu0
    %v947 = vadd.f32 0.0, %v946
    %v948 = vpop.f32.mrf.mxu0
    %949 = vdwg.mxu0
    %v951 = vsel %vm289, %v876, 0
    %953 = vmatprep.subr.mxu0 0.0
    %954 = vmatpush1.msra.mxu0 0.0
    %955 = vmatprep.subr.mxu0 0.0
    %956 = vmatpush1.msra.mxu0 0.0
    %957 = vmatprep.subr.mxu0 0.0
    %958 = vmatpush1.msra.mxu0 0.0
    %959 = vmatprep.subr.mxu0 0.0
    %960 = vmatpush1.msra.mxu0 0.0
    %961 = vmatprep.subr.mxu0 0.0
    %962 = vmatpush1.msra.mxu0 0.0
    %963 = vmatprep.subr.mxu0 0.0
    %964 = vmatpush1.msra.mxu0 0.0
    %965 = vmatprep.subr.mxu0 0.0
    %966 = vmatpush1.msra.mxu0 0.0
    %967 = vmatprep.subr.mxu0 0.0
    %968 = vmatpush1.msra.mxu0 0.0
    %969 = vmatprep.subr.mxu0 0.0
    %970 = vmatpush1.msra.mxu0 0.0
    %971 = vmatprep.subr.mxu0 0.0
    %972 = vmatpush1.msra.mxu0 0.0
    %973 = vmatprep.subr.mxu0 0.0
    %974 = vmatpush1.msra.mxu0 0.0
    %975 = vmatprep.subr.mxu0 0.0
    %976 = vmatpush1.msra.mxu0 0.0
    %977 = vmatprep.subr.mxu0 0.0
    %978 = vmatpush1.msra.mxu0 0.0
    %979 = vmatprep.subr.mxu0 0.0
    %980 = vmatpush1.msra.mxu0 0.0
    %981 = vmatprep.subr.mxu0 0.0
    %982 = vmatpush1.msra.mxu0 0.0
    %983 = vmatprep.subr.mxu0 0.0
    %984 = vmatpush1.msra.mxu0 %v288
    %985 = vmatprep.subr.mxu0 0.0
    %986 = vmatpush2.msra.mxu0 0.0
    %987 = vmatprep.subr.mxu0 0.0
    %988 = vmatpush2.msra.mxu0 0.0
    %989 = vmatprep.subr.mxu0 0.0
    %990 = vmatpush2.msra.mxu0 0.0
    %991 = vmatprep.subr.mxu0 0.0
    %992 = vmatpush2.msra.mxu0 0.0
    %993 = vmatprep.subr.mxu0 0.0
    %994 = vmatpush2.msra.mxu0 0.0
    %995 = vmatprep.subr.mxu0 0.0
    %996 = vmatpush2.msra.mxu0 0.0
    %997 = vmatprep.subr.mxu0 0.0
    %998 = vmatpush2.msra.mxu0 0.0
    %999 = vmatprep.subr.mxu0 0.0
    %1000 = vmatpush2.msra.mxu0 0.0
    %1001 = vmatprep.subr.mxu0 0.0
    %1002 = vmatpush2.msra.mxu0 0.0
    %1003 = vmatprep.subr.mxu0 0.0
    %1004 = vmatpush2.msra.mxu0 0.0
    %1005 = vmatprep.subr.mxu0 0.0
    %1006 = vmatpush2.msra.mxu0 0.0
    %1007 = vmatprep.subr.mxu0 0.0
    %1008 = vmatpush2.msra.mxu0 0.0
    %1009 = vmatprep.subr.mxu0 0.0
    %1010 = vmatpush2.msra.mxu0 0.0
    %1011 = vmatprep.subr.mxu0 0.0
    %1012 = vmatpush2.msra.mxu0 0.0
    %1013 = vmatprep.subr.mxu0 0.0
    %1014 = vmatpush2.msra.mxu0 0.0
    %1015 = vmatprep.subr.mxu0 0.0
    %1016 = vmatpush2.msra.mxu0 0.0
    %1017 = vmatprep.mubr.f32.mxu0 0.0
    %1018 = vmatmul.mubr.f32.gmra.mxu0 %v951
    %v1019 = vpop.f32.mrf.mxu0
    %v1020 = vadd.f32 0.0, %v1019
    %v1021 = vpop.f32.mrf.mxu0
    %1022 = vdwg.mxu0
    %v1023 = vlaneseq
    %v1024 = vshrl.u32 %v1023, 7
    %v1025 = vsub.s32 0, %v1024
    %v1026 = vrot.slane %v947, %v1025
    %v1027 = vmul.f32 %v686, %v1026
    %v1028 = vmul.f32 %v691, %v1026
    %v1029 = vmul.f32 %v696, %v1026
    %v1030 = vmul.f32 %v701, %v1026
    %v1031 = vlaneseq
    %v1032 = vshrl.u32 %v1031, 7
    %v1033 = vsub.s32 0, %v1032
    %v1034 = vrot.slane %v1020, %v1033
    %v1035 = vadd.f32 %v1027, %v1034
    %v1036 = vadd.f32 %v1028, %v1034
    %v1037 = vadd.f32 %v1029, %v1034
    %v1038 = vadd.f32 %v1030, %v1034
    %v1039 = vmax.f32 %v1035, 0.0
    %v1040 = vmax.f32 %v1036, 0.0
    %v1041 = vmax.f32 %v1037, 0.0
    %v1042 = vmax.f32 %v1038, 0.0
    %v1047 = vrot.slane %v1039, 7
    %v1048 = vrot.slane %v1040, 7
    %v1049 = vsel %vm460, %v1047, %v1048
    %v1050 = vrot.slane %v1041, 7
    %v1051 = vrot.slane %v1042, 7
    %v1052 = vsel %vm460, %v1050, %v1051
    %v1057 = vsel %vm460, 0.0, %v1047
    %v1058 = vsel %vm460, 0.0, %v1050
    %v1059 = vrot.slane %v1039, 1
    %v1060 = vrot.slane %v1040, 1
    %v1061 = vsel %vm473, %v1059, %v1060
    %v1062 = vrot.slane %v1041, 1
    %v1063 = vrot.slane %v1042, 1
    %v1064 = vsel %vm473, %v1062, %v1063
    %v1069 = vsel %vm473, %v1060, 0.0
    %v1070 = vsel %vm473, %v1063, 0.0
    %v1071 = vld [vmem:[#allocation5] sm:$0xff]
    %v1072 = vld [vmem:[#allocation5 + $0x8] sm:$0xff]
    %v1073 = vld [vmem:[#allocation5 + $0x10] sm:$0xff]
    %v1074 = vld [vmem:[#allocation5 + $0x18] sm:$0xff]
    %v1075 = vld [vmem:[#allocation5 + $0x20] sm:$0xff]
    %v1076 = vld [vmem:[#allocation5 + $0x28] sm:$0xff]
    %v1077 = vld [vmem:[#allocation5 + $0x30] sm:$0xff]
    %v1078 = vld [vmem:[#allocation5 + $0x38] sm:$0xff]
    %v1079 = vld [vmem:[#allocation5 + $0x40] sm:$0xff]
    %v1080 = vld [vmem:[#allocation5 + $0x48] sm:$0xff]
    %v1081 = vld [vmem:[#allocation5 + $0x50] sm:$0xff]
    %v1082 = vld [vmem:[#allocation5 + $0x58] sm:$0xff]
    %v1083 = vld [vmem:[#allocation5 + $0x60] sm:$0xff]
    %v1084 = vld [vmem:[#allocation5 + $0x68] sm:$0xff]
    %v1085 = vld [vmem:[#allocation5 + $0x70] sm:$0xff]
    %v1086 = vld [vmem:[#allocation5 + $0x78] sm:$0xff]
    %v1087 = vld [vmem:[#allocation5 + $0x80] sm:$0xff]
    %v1088 = vld [vmem:[#allocation5 + $0x88] sm:$0xff]
    %v1089 = vld [vmem:[#allocation5 + $0x90] sm:$0xff]
    %v1090 = vld [vmem:[#allocation5 + $0x98] sm:$0xff]
    %v1091 = vld [vmem:[#allocation5 + $0xa0] sm:$0xff]
    %v1092 = vld [vmem:[#allocation5 + $0xa8] sm:$0xff]
    %v1093 = vld [vmem:[#allocation5 + $0xb0] sm:$0xff]
    %v1094 = vld [vmem:[#allocation5 + $0xb8] sm:$0xff]
    %v1095 = vld [vmem:[#allocation5 + $0xc0] sm:$0xff]
    %v1096 = vld [vmem:[#allocation5 + $0xc8] sm:$0xff]
    %v1097 = vld [vmem:[#allocation5 + $0xd0] sm:$0xff]
    %v1098 = vld [vmem:[#allocation5 + $0xd8] sm:$0xff]
    %v1099 = vld [vmem:[#allocation5 + $0xe0] sm:$0xff]
    %v1100 = vld [vmem:[#allocation5 + $0xe8] sm:$0xff]
    %v1101 = vld [vmem:[#allocation5 + $0xf0] sm:$0xff]
    %v1102 = vld [vmem:[#allocation5 + $0xf8] sm:$0xff]
    %v1103 = vld [vmem:[#allocation5 + $0x100] sm:$0xff]
    %v1104 = vld [vmem:[#allocation5 + $0x108] sm:$0xff]
    %v1105 = vld [vmem:[#allocation5 + $0x110] sm:$0xff]
    %v1106 = vld [vmem:[#allocation5 + $0x118] sm:$0xff]
    %v1107 = vld [vmem:[#allocation5 + $0x120] sm:$0xff]
    %v1108 = vld [vmem:[#allocation5 + $0x128] sm:$0xff]
    %v1109 = vld [vmem:[#allocation5 + $0x130] sm:$0xff]
    %v1110 = vld [vmem:[#allocation5 + $0x138] sm:$0xff]
    %v1111 = vld [vmem:[#allocation5 + $0x140] sm:$0xff]
    %v1112 = vld [vmem:[#allocation5 + $0x148] sm:$0xff]
    %v1113 = vld [vmem:[#allocation5 + $0x150] sm:$0xff]
    %v1114 = vld [vmem:[#allocation5 + $0x158] sm:$0xff]
    %v1115 = vld [vmem:[#allocation5 + $0x160] sm:$0xff]
    %v1116 = vld [vmem:[#allocation5 + $0x168] sm:$0xff]
    %v1117 = vld [vmem:[#allocation5 + $0x170] sm:$0xff]
    %v1118 = vld [vmem:[#allocation5 + $0x178] sm:$0xff]
    %1119 = vmatprep.subr.mxu0 0.0
    %1120 = vmatpush1.msra.mxu0 %v1086
    %1121 = vmatprep.subr.mxu0 0.0
    %1122 = vmatpush1.msra.mxu0 %v1085
    %1123 = vmatprep.subr.mxu0 0.0
    %1124 = vmatpush1.msra.mxu0 %v1084
    %1125 = vmatprep.subr.mxu0 0.0
    %1126 = vmatpush1.msra.mxu0 %v1083
    %1127 = vmatprep.subr.mxu0 0.0
    %1128 = vmatpush1.msra.mxu0 %v1082
    %1129 = vmatprep.subr.mxu0 0.0
    %1130 = vmatpush1.msra.mxu0 %v1081
    %1131 = vmatprep.subr.mxu0 0.0
    %1132 = vmatpush1.msra.mxu0 %v1080
    %1133 = vmatprep.subr.mxu0 0.0
    %1134 = vmatpush1.msra.mxu0 %v1079
    %1135 = vmatprep.subr.mxu0 0.0
    %1136 = vmatpush1.msra.mxu0 %v1078
    %1137 = vmatprep.subr.mxu0 0.0
    %1138 = vmatpush1.msra.mxu0 %v1077
    %1139 = vmatprep.subr.mxu0 0.0
    %1140 = vmatpush1.msra.mxu0 %v1076
    %1141 = vmatprep.subr.mxu0 0.0
    %1142 = vmatpush1.msra.mxu0 %v1075
    %1143 = vmatprep.subr.mxu0 0.0
    %1144 = vmatpush1.msra.mxu0 %v1074
    %1145 = vmatprep.subr.mxu0 0.0
    %1146 = vmatpush1.msra.mxu0 %v1073
    %1147 = vmatprep.subr.mxu0 0.0
    %1148 = vmatpush1.msra.mxu0 %v1072
    %1149 = vmatprep.subr.mxu0 0.0
    %1150 = vmatpush1.msra.mxu0 %v1071
    %1151 = vmatprep.subr.mxu0 0.0
    %1152 = vmatpush2.msra.mxu0 %v1102
    %1153 = vmatprep.subr.mxu0 0.0
    %1154 = vmatpush2.msra.mxu0 %v1101
    %1155 = vmatprep.subr.mxu0 0.0
    %1156 = vmatpush2.msra.mxu0 %v1100
    %1157 = vmatprep.subr.mxu0 0.0
    %1158 = vmatpush2.msra.mxu0 %v1099
    %1159 = vmatprep.subr.mxu0 0.0
    %1160 = vmatpush2.msra.mxu0 %v1098
    %1161 = vmatprep.subr.mxu0 0.0
    %1162 = vmatpush2.msra.mxu0 %v1097
    %1163 = vmatprep.subr.mxu0 0.0
    %1164 = vmatpush2.msra.mxu0 %v1096
    %1165 = vmatprep.subr.mxu0 0.0
    %1166 = vmatpush2.msra.mxu0 %v1095
    %1167 = vmatprep.subr.mxu0 0.0
    %1168 = vmatpush2.msra.mxu0 %v1094
    %1169 = vmatprep.subr.mxu0 0.0
    %1170 = vmatpush2.msra.mxu0 %v1093
    %1171 = vmatprep.subr.mxu0 0.0
    %1172 = vmatpush2.msra.mxu0 %v1092
    %1173 = vmatprep.subr.mxu0 0.0
    %1174 = vmatpush2.msra.mxu0 %v1091
    %1175 = vmatprep.subr.mxu0 0.0
    %1176 = vmatpush2.msra.mxu0 %v1090
    %1177 = vmatprep.subr.mxu0 0.0
    %1178 = vmatpush2.msra.mxu0 %v1089
    %1179 = vmatprep.subr.mxu0 0.0
    %1180 = vmatpush2.msra.mxu0 %v1088
    %1181 = vmatprep.subr.mxu0 0.0
    %1182 = vmatpush2.msra.mxu0 %v1087
    %1183 = vmatprep.mubr.f32.mxu0 %v1039
    %1184 = vmatmul.mubr.f32.gmra.mxu0 %v1057
    %v1185 = vpop.f32.mrf.mxu0
    %v1186 = vadd.f32 0.0, %v1185
    %v1187 = vpop.f32.mrf.mxu0
    %1188 = vmatprep.mubr.f32.mxu0 %v1040
    %1189 = vmatmul.mubr.f32.gmra.mxu0 %v1049
    %v1190 = vpop.f32.mrf.mxu0
    %v1191 = vadd.f32 0.0, %v1190
    %v1192 = vpop.f32.mrf.mxu0
    %1193 = vmatprep.mubr.f32.mxu0 %v1041
    %1194 = vmatmul.mubr.f32.gmra.mxu0 %v1058
    %v1195 = vpop.f32.mrf.mxu0
    %v1196 = vadd.f32 0.0, %v1195
    %v1197 = vpop.f32.mrf.mxu0
    %1198 = vmatprep.mubr.f32.mxu0 %v1042
    %1199 = vmatmul.mubr.f32.gmra.mxu0 %v1052
    %v1200 = vpop.f32.mrf.mxu0
    %v1201 = vadd.f32 0.0, %v1200
    %v1202 = vpop.f32.mrf.mxu0
    %1203 = vdwg.mxu0
    %1204 = vmatprep.subr.mxu0 0.0
    %1205 = vmatpush1.msra.mxu0 %v1118
    %1206 = vmatprep.subr.mxu0 0.0
    %1207 = vmatpush1.msra.mxu0 %v1117
    %1208 = vmatprep.subr.mxu0 0.0
    %1209 = vmatpush1.msra.mxu0 %v1116
    %1210 = vmatprep.subr.mxu0 0.0
    %1211 = vmatpush1.msra.mxu0 %v1115
    %1212 = vmatprep.subr.mxu0 0.0
    %1213 = vmatpush1.msra.mxu0 %v1114
    %1214 = vmatprep.subr.mxu0 0.0
    %1215 = vmatpush1.msra.mxu0 %v1113
    %1216 = vmatprep.subr.mxu0 0.0
    %1217 = vmatpush1.msra.mxu0 %v1112
    %1218 = vmatprep.subr.mxu0 0.0
    %1219 = vmatpush1.msra.mxu0 %v1111
    %1220 = vmatprep.subr.mxu0 0.0
    %1221 = vmatpush1.msra.mxu0 %v1110
    %1222 = vmatprep.subr.mxu0 0.0
    %1223 = vmatpush1.msra.mxu0 %v1109
    %1224 = vmatprep.subr.mxu0 0.0
    %1225 = vmatpush1.msra.mxu0 %v1108
    %1226 = vmatprep.subr.mxu0 0.0
    %1227 = vmatpush1.msra.mxu0 %v1107
    %1228 = vmatprep.subr.mxu0 0.0
    %1229 = vmatpush1.msra.mxu0 %v1106
    %1230 = vmatprep.subr.mxu0 0.0
    %1231 = vmatpush1.msra.mxu0 %v1105
    %1232 = vmatprep.subr.mxu0 0.0
    %1233 = vmatpush1.msra.mxu0 %v1104
    %1234 = vmatprep.subr.mxu0 0.0
    %1235 = vmatpush1.msra.mxu0 %v1103
    %1236 = vmatprep.subr.mxu0 0.0
    %1237 = vmatpush2.msra.mxu0 0.0
    %1238 = vmatprep.subr.mxu0 0.0
    %1239 = vmatpush2.msra.mxu0 0.0
    %1240 = vmatprep.subr.mxu0 0.0
    %1241 = vmatpush2.msra.mxu0 0.0
    %1242 = vmatprep.subr.mxu0 0.0
    %1243 = vmatpush2.msra.mxu0 0.0
    %1244 = vmatprep.subr.mxu0 0.0
    %1245 = vmatpush2.msra.mxu0 0.0
    %1246 = vmatprep.subr.mxu0 0.0
    %1247 = vmatpush2.msra.mxu0 0.0
    %1248 = vmatprep.subr.mxu0 0.0
    %1249 = vmatpush2.msra.mxu0 0.0
    %1250 = vmatprep.subr.mxu0 0.0
    %1251 = vmatpush2.msra.mxu0 0.0
    %1252 = vmatprep.subr.mxu0 0.0
    %1253 = vmatpush2.msra.mxu0 0.0
    %1254 = vmatprep.subr.mxu0 0.0
    %1255 = vmatpush2.msra.mxu0 0.0
    %1256 = vmatprep.subr.mxu0 0.0
    %1257 = vmatpush2.msra.mxu0 0.0
    %1258 = vmatprep.subr.mxu0 0.0
    %1259 = vmatpush2.msra.mxu0 0.0
    %1260 = vmatprep.subr.mxu0 0.0
    %1261 = vmatpush2.msra.mxu0 0.0
    %1262 = vmatprep.subr.mxu0 0.0
    %1263 = vmatpush2.msra.mxu0 0.0
    %1264 = vmatprep.subr.mxu0 0.0
    %1265 = vmatpush2.msra.mxu0 0.0
    %1266 = vmatprep.subr.mxu0 0.0
    %1267 = vmatpush2.msra.mxu0 0.0
    %1268 = vmatprep.mubr.f32.mxu0 0.0
    %1269 = vmatmul.mubr.f32.gmra.mxu0 %v1061
    %v1270 = vpop.f32.mrf.mxu0
    %v1271 = vadd.f32 %v1186, %v1270
    %v1272 = vpop.f32.mrf.mxu0
    %1273 = vmatprep.mubr.f32.mxu0 0.0
    %1274 = vmatmul.mubr.f32.gmra.mxu0 %v1069
    %v1275 = vpop.f32.mrf.mxu0
    %v1276 = vadd.f32 %v1191, %v1275
    %v1277 = vpop.f32.mrf.mxu0
    %1278 = vmatprep.mubr.f32.mxu0 0.0
    %1279 = vmatmul.mubr.f32.gmra.mxu0 %v1064
    %v1280 = vpop.f32.mrf.mxu0
    %v1281 = vadd.f32 %v1196, %v1280
    %v1282 = vpop.f32.mrf.mxu0
    %1283 = vmatprep.mubr.f32.mxu0 0.0
    %1284 = vmatmul.mubr.f32.gmra.mxu0 %v1070
    %v1285 = vpop.f32.mrf.mxu0
    %v1286 = vadd.f32 %v1201, %v1285
    %v1287 = vpop.f32.mrf.mxu0
    %1288 = vdwg.mxu0
    %v1289 = vadd.f32 %v1271, %v1276
    %v1290 = vrot.slane %v1289, 4
    %v1291 = vadd.f32 %v1289, %v1290
    %v1292 = vrot.slane %v1291, 2
    %v1293 = vadd.f32 %v1291, %v1292
    %v1294 = vrot.slane %v1293, 1
    %v1295 = vadd.f32 %v1293, %v1294
    %v1296 = vadd.f32 %v1281, %v1286
    %v1297 = vrot.slane %v1296, 4
    %v1298 = vadd.f32 %v1296, %v1297
    %v1299 = vrot.slane %v1298, 2
    %v1300 = vadd.f32 %v1298, %v1299
    %v1301 = vrot.slane %v1300, 1
    %v1302 = vadd.f32 %v1300, %v1301
    %vm1305 = vcmask 1041409
    %v1306 = vsel %vm1305, %v1302, %v1295
    %1308 = vmatprep.subr.mxu0 0.0
    %1309 = vmatpush1.msra.mxu0 %v123
    %1310 = vmatprep.subr.mxu0 0.0
    %1311 = vmatpush1.msra.mxu0 %v122
    %1312 = vmatprep.subr.mxu0 0.0
    %1313 = vmatpush1.msra.mxu0 %v121
    %1314 = vmatprep.subr.mxu0 0.0
    %1315 = vmatpush1.msra.mxu0 %v120
    %1316 = vmatprep.subr.mxu0 0.0
    %1317 = vmatpush1.msra.mxu0 %v119
    %1318 = vmatprep.subr.mxu0 0.0
    %1319 = vmatpush1.msra.mxu0 %v118
    %1320 = vmatprep.subr.mxu0 0.0
    %1321 = vmatpush1.msra.mxu0 %v117
    %1322 = vmatprep.subr.mxu0 0.0
    %1323 = vmatpush1.msra.mxu0 %v116
    %1324 = vmatprep.subr.mxu0 0.0
    %1325 = vmatpush1.msra.mxu0 %v115
    %1326 = vmatprep.subr.mxu0 0.0
    %1327 = vmatpush1.msra.mxu0 %v114
    %1328 = vmatprep.subr.mxu0 0.0
    %1329 = vmatpush1.msra.mxu0 %v113
    %1330 = vmatprep.subr.mxu0 0.0
    %1331 = vmatpush1.msra.mxu0 %v112
    %1332 = vmatprep.subr.mxu0 0.0
    %1333 = vmatpush1.msra.mxu0 %v111
    %1334 = vmatprep.subr.mxu0 0.0
    %1335 = vmatpush1.msra.mxu0 %v110
    %1336 = vmatprep.subr.mxu0 0.0
    %1337 = vmatpush1.msra.mxu0 %v109
    %1338 = vmatprep.subr.mxu0 0.0
    %1339 = vmatpush1.msra.mxu0 %v108
    %1340 = vmatprep.subr.mxu0 0.0
    %1341 = vmatpush2.msra.mxu0 0.0
    %1342 = vmatprep.subr.mxu0 0.0
    %1343 = vmatpush2.msra.mxu0 0.0
    %1344 = vmatprep.subr.mxu0 0.0
    %1345 = vmatpush2.msra.mxu0 0.0
    %1346 = vmatprep.subr.mxu0 0.0
    %1347 = vmatpush2.msra.mxu0 0.0
    %1348 = vmatprep.subr.mxu0 0.0
    %1349 = vmatpush2.msra.mxu0 0.0
    %1350 = vmatprep.subr.mxu0 0.0
    %1351 = vmatpush2.msra.mxu0 0.0
    %1352 = vmatprep.subr.mxu0 0.0
    %1353 = vmatpush2.msra.mxu0 0.0
    %1354 = vmatprep.subr.mxu0 0.0
    %1355 = vmatpush2.msra.mxu0 0.0
    %1356 = vmatprep.subr.mxu0 0.0
    %1357 = vmatpush2.msra.mxu0 0.0
    %1358 = vmatprep.subr.mxu0 0.0
    %1359 = vmatpush2.msra.mxu0 0.0
    %1360 = vmatprep.subr.mxu0 0.0
    %1361 = vmatpush2.msra.mxu0 0.0
    %1362 = vmatprep.subr.mxu0 0.0
    %1363 = vmatpush2.msra.mxu0 0.0
    %1364 = vmatprep.subr.mxu0 0.0
    %1365 = vmatpush2.msra.mxu0 0.0
    %1366 = vmatprep.subr.mxu0 0.0
    %1367 = vmatpush2.msra.mxu0 0.0
    %1368 = vmatprep.subr.mxu0 0.0
    %1369 = vmatpush2.msra.mxu0 0.0
    %1370 = vmatprep.subr.mxu0 0.0
    %1371 = vmatpush2.msra.mxu0 0.0
    %1372 = vmatprep.mubr.f32.mxu0 0.0
    %1373 = vmatmul.mubr.f32.gmra.mxu0 %v1306
    %v1374 = vpop.f32.mrf.mxu0
    %v1375 = vadd.f32 0.0, %v1374
    %v1376 = vpop.f32.mrf.mxu0
    %1377 = vdwg.mxu0
    %v1378 = vmul.f32 %v1375, 0.00390625
    %v1379 = vld [vmem:[%s10] sm:$0xff]
    %v1380 = vld [vmem:[%s11] sm:$0x1]
    %v1382 = vlaneseq
    %v1383 = vshrl.u32 %v1382, 7
    %v1384 = vsub.s32 0, %v1383
    %v1385 = vrot.slane %v1380, %v1384
    %v1388 = vsel %vm289, %v1378, 0
    %1390 = vmatprep.subr.mxu0 0.0
    %1391 = vmatpush1.msra.mxu0 0.0
    %1392 = vmatprep.subr.mxu0 0.0
    %1393 = vmatpush1.msra.mxu0 0.0
    %1394 = vmatprep.subr.mxu0 0.0
    %1395 = vmatpush1.msra.mxu0 0.0
    %1396 = vmatprep.subr.mxu0 0.0
    %1397 = vmatpush1.msra.mxu0 0.0
    %1398 = vmatprep.subr.mxu0 0.0
    %1399 = vmatpush1.msra.mxu0 0.0
    %1400 = vmatprep.subr.mxu0 0.0
    %1401 = vmatpush1.msra.mxu0 0.0
    %1402 = vmatprep.subr.mxu0 0.0
    %1403 = vmatpush1.msra.mxu0 0.0
    %1404 = vmatprep.subr.mxu0 0.0
    %1405 = vmatpush1.msra.mxu0 0.0
    %1406 = vmatprep.subr.mxu0 0.0
    %1407 = vmatpush1.msra.mxu0 0.0
    %1408 = vmatprep.subr.mxu0 0.0
    %1409 = vmatpush1.msra.mxu0 0.0
    %1410 = vmatprep.subr.mxu0 0.0
    %1411 = vmatpush1.msra.mxu0 0.0
    %1412 = vmatprep.subr.mxu0 0.0
    %1413 = vmatpush1.msra.mxu0 0.0
    %1414 = vmatprep.subr.mxu0 0.0
    %1415 = vmatpush1.msra.mxu0 0.0
    %1416 = vmatprep.subr.mxu0 0.0
    %1417 = vmatpush1.msra.mxu0 0.0
    %1418 = vmatprep.subr.mxu0 0.0
    %1419 = vmatpush1.msra.mxu0 0.0
    %1420 = vmatprep.subr.mxu0 0.0
    %1421 = vmatpush1.msra.mxu0 %v1379
    %1422 = vmatprep.subr.mxu0 0.0
    %1423 = vmatpush2.msra.mxu0 0.0
    %1424 = vmatprep.subr.mxu0 0.0
    %1425 = vmatpush2.msra.mxu0 0.0
    %1426 = vmatprep.subr.mxu0 0.0
    %1427 = vmatpush2.msra.mxu0 0.0
    %1428 = vmatprep.subr.mxu0 0.0
    %1429 = vmatpush2.msra.mxu0 0.0
    %1430 = vmatprep.subr.mxu0 0.0
    %1431 = vmatpush2.msra.mxu0 0.0
    %1432 = vmatprep.subr.mxu0 0.0
    %1433 = vmatpush2.msra.mxu0 0.0
    %1434 = vmatprep.subr.mxu0 0.0
    %1435 = vmatpush2.msra.mxu0 0.0
    %1436 = vmatprep.subr.mxu0 0.0
    %1437 = vmatpush2.msra.mxu0 0.0
    %1438 = vmatprep.subr.mxu0 0.0
    %1439 = vmatpush2.msra.mxu0 0.0
    %1440 = vmatprep.subr.mxu0 0.0
    %1441 = vmatpush2.msra.mxu0 0.0
    %1442 = vmatprep.subr.mxu0 0.0
    %1443 = vmatpush2.msra.mxu0 0.0
    %1444 = vmatprep.subr.mxu0 0.0
    %1445 = vmatpush2.msra.mxu0 0.0
    %1446 = vmatprep.subr.mxu0 0.0
    %1447 = vmatpush2.msra.mxu0 0.0
    %1448 = vmatprep.subr.mxu0 0.0
    %1449 = vmatpush2.msra.mxu0 0.0
    %1450 = vmatprep.subr.mxu0 0.0
    %1451 = vmatpush2.msra.mxu0 0.0
    %1452 = vmatprep.subr.mxu0 0.0
    %1453 = vmatpush2.msra.mxu0 0.0
    %1454 = vmatprep.mubr.f32.mxu0 0.0
    %1455 = vmatmul.mubr.f32.gmra.mxu0 %v1388
    %v1456 = vpop.f32.mrf.mxu0
    %v1457 = vadd.f32 %v1385, %v1456
    %v1458 = vpop.f32.mrf.mxu0
    %1459 = vdwg.mxu0
    %v1460 = vmax.f32 %v1457, 0.0
    %v1461 = vld [vmem:[%s12] sm:$0x3]
    %v1462 = vld [vmem:[%s13] sm:$0x1]
    %v1464 = vlaneseq
    %v1465 = vshrl.u32 %v1464, 7
    %v1466 = vsub.s32 0, %v1465
    %v1467 = vrot.slane %v1462, %v1466
    %vm1469 = vcmask 15360
    %v1471 = vsel %vm1469, %v1460, 0
    %vm1473 = vcmask 1041408
    %v1475 = vsel %vm1473, %v1461, 0
    %1477 = vmatprep.subr.mxu0 0.0
    %1478 = vmatpush1.msra.mxu0 0.0
    %1479 = vmatprep.subr.mxu0 0.0
    %1480 = vmatpush1.msra.mxu0 0.0
    %1481 = vmatprep.subr.mxu0 0.0
    %1482 = vmatpush1.msra.mxu0 0.0
    %1483 = vmatprep.subr.mxu0 0.0
    %1484 = vmatpush1.msra.mxu0 0.0
    %1485 = vmatprep.subr.mxu0 0.0
    %1486 = vmatpush1.msra.mxu0 0.0
    %1487 = vmatprep.subr.mxu0 0.0
    %1488 = vmatpush1.msra.mxu0 0.0
    %1489 = vmatprep.subr.mxu0 0.0
    %1490 = vmatpush1.msra.mxu0 0.0
    %1491 = vmatprep.subr.mxu0 0.0
    %1492 = vmatpush1.msra.mxu0 0.0
    %1493 = vmatprep.subr.mxu0 0.0
    %1494 = vmatpush1.msra.mxu0 0.0
    %1495 = vmatprep.subr.mxu0 0.0
    %1496 = vmatpush1.msra.mxu0 0.0
    %1497 = vmatprep.subr.mxu0 0.0
    %1498 = vmatpush1.msra.mxu0 0.0
    %1499 = vmatprep.subr.mxu0 0.0
    %1500 = vmatpush1.msra.mxu0 0.0
    %1501 = vmatprep.subr.mxu0 0.0
    %1502 = vmatpush1.msra.mxu0 0.0
    %1503 = vmatprep.subr.mxu0 0.0
    %1504 = vmatpush1.msra.mxu0 0.0
    %1505 = vmatprep.subr.mxu0 0.0
    %1506 = vmatpush1.msra.mxu0 0.0
    %1507 = vmatprep.subr.mxu0 0.0
    %1508 = vmatpush1.msra.mxu0 %v1475
    %1509 = vmatprep.subr.mxu0 0.0
    %1510 = vmatpush2.msra.mxu0 0.0
    %1511 = vmatprep.subr.mxu0 0.0
    %1512 = vmatpush2.msra.mxu0 0.0
    %1513 = vmatprep.subr.mxu0 0.0
    %1514 = vmatpush2.msra.mxu0 0.0
    %1515 = vmatprep.subr.mxu0 0.0
    %1516 = vmatpush2.msra.mxu0 0.0
    %1517 = vmatprep.subr.mxu0 0.0
    %1518 = vmatpush2.msra.mxu0 0.0
    %1519 = vmatprep.subr.mxu0 0.0
    %1520 = vmatpush2.msra.mxu0 0.0
    %1521 = vmatprep.subr.mxu0 0.0
    %1522 = vmatpush2.msra.mxu0 0.0
    %1523 = vmatprep.subr.mxu0 0.0
    %1524 = vmatpush2.msra.mxu0 0.0
    %1525 = vmatprep.subr.mxu0 0.0
    %1526 = vmatpush2.msra.mxu0 0.0
    %1527 = vmatprep.subr.mxu0 0.0
    %1528 = vmatpush2.msra.mxu0 0.0
    %1529 = vmatprep.subr.mxu0 0.0
    %1530 = vmatpush2.msra.mxu0 0.0
    %1531 = vmatprep.subr.mxu0 0.0
    %1532 = vmatpush2.msra.mxu0 0.0
    %1533 = vmatprep.subr.mxu0 0.0
    %1534 = vmatpush2.msra.mxu0 0.0
    %1535 = vmatprep.subr.mxu0 0.0
    %1536 = vmatpush2.msra.mxu0 0.0
    %1537 = vmatprep.subr.mxu0 0.0
    %1538 = vmatpush2.msra.mxu0 0.0
    %1539 = vmatprep.subr.mxu0 0.0
    %1540 = vmatpush2.msra.mxu0 0.0
    %1541 = vmatprep.mubr.f32.mxu0 0.0
    %1542 = vmatmul.mubr.f32.gmra.mxu0 %v1471
    %v1543 = vpop.f32.mrf.mxu0
    %v1544 = vadd.f32 %v1467, %v1543
    %v1545 = vpop.f32.mrf.mxu0
    %1546 = vdwg.mxu0
    %v1547 = vxor.u32 %v1544, 2147483648
    %v1548 = vmul.f32 %v1547, 1.442695
    %v1549 = vpow.pop %v1548
    %v1550 = vadd.f32 %v1549, 1.0
    %v1551 = vrcp.pop %v1550
    %v1552 = vmul.f32 1.0, %v1551
    %v1554 = vsel %vm289, %v1552, 0
    %1556 = vmatprep.subr.mxu0 0.0
    %1557 = vmatpush1.msra.mxu0 0.0
    %1558 = vmatprep.subr.mxu0 0.0
    %1559 = vmatpush1.msra.mxu0 0.0
    %1560 = vmatprep.subr.mxu0 0.0
    %1561 = vmatpush1.msra.mxu0 0.0
    %1562 = vmatprep.subr.mxu0 0.0
    %1563 = vmatpush1.msra.mxu0 0.0
    %1564 = vmatprep.subr.mxu0 0.0
    %1565 = vmatpush1.msra.mxu0 0.0
    %1566 = vmatprep.subr.mxu0 0.0
    %1567 = vmatpush1.msra.mxu0 0.0
    %1568 = vmatprep.subr.mxu0 0.0
    %1569 = vmatpush1.msra.mxu0 0.0
    %1570 = vmatprep.subr.mxu0 0.0
    %1571 = vmatpush1.msra.mxu0 0.0
    %1572 = vmatprep.subr.mxu0 0.0
    %1573 = vmatpush1.msra.mxu0 0.0
    %1574 = vmatprep.subr.mxu0 0.0
    %1575 = vmatpush1.msra.mxu0 0.0
    %1576 = vmatprep.subr.mxu0 0.0
    %1577 = vmatpush1.msra.mxu0 0.0
    %1578 = vmatprep.subr.mxu0 0.0
    %1579 = vmatpush1.msra.mxu0 0.0
    %1580 = vmatprep.subr.mxu0 0.0
    %1581 = vmatpush1.msra.mxu0 0.0
    %1582 = vmatprep.subr.mxu0 0.0
    %1583 = vmatpush1.msra.mxu0 0.0
    %1584 = vmatprep.subr.mxu0 0.0
    %1585 = vmatpush1.msra.mxu0 0.0
    %1586 = vmatprep.subr.mxu0 0.0
    %1587 = vmatpush1.msra.mxu0 %v288
    %1588 = vmatprep.subr.mxu0 0.0
    %1589 = vmatpush2.msra.mxu0 0.0
    %1590 = vmatprep.subr.mxu0 0.0
    %1591 = vmatpush2.msra.mxu0 0.0
    %1592 = vmatprep.subr.mxu0 0.0
    %1593 = vmatpush2.msra.mxu0 0.0
    %1594 = vmatprep.subr.mxu0 0.0
    %1595 = vmatpush2.msra.mxu0 0.0
    %1596 = vmatprep.subr.mxu0 0.0
    %1597 = vmatpush2.msra.mxu0 0.0
    %1598 = vmatprep.subr.mxu0 0.0
    %1599 = vmatpush2.msra.mxu0 0.0
    %1600 = vmatprep.subr.mxu0 0.0
    %1601 = vmatpush2.msra.mxu0 0.0
    %1602 = vmatprep.subr.mxu0 0.0
    %1603 = vmatpush2.msra.mxu0 0.0
    %1604 = vmatprep.subr.mxu0 0.0
    %1605 = vmatpush2.msra.mxu0 0.0
    %1606 = vmatprep.subr.mxu0 0.0
    %1607 = vmatpush2.msra.mxu0 0.0
    %1608 = vmatprep.subr.mxu0 0.0
    %1609 = vmatpush2.msra.mxu0 0.0
    %1610 = vmatprep.subr.mxu0 0.0
    %1611 = vmatpush2.msra.mxu0 0.0
    %1612 = vmatprep.subr.mxu0 0.0
    %1613 = vmatpush2.msra.mxu0 0.0
    %1614 = vmatprep.subr.mxu0 0.0
    %1615 = vmatpush2.msra.mxu0 0.0
    %1616 = vmatprep.subr.mxu0 0.0
    %1617 = vmatpush2.msra.mxu0 0.0
    %1618 = vmatprep.subr.mxu0 0.0
    %1619 = vmatpush2.msra.mxu0 0.0
    %1620 = vmatprep.mubr.f32.mxu0 0.0
    %1621 = vmatmul.mubr.f32.gmra.mxu0 %v1554
    %v1622 = vpop.f32.mrf.mxu0
    %v1623 = vadd.f32 0.0, %v1622
    %v1624 = vpop.f32.mrf.mxu0
    %1625 = vdwg.mxu0
    %v1628 = vunpack.c.l.s4 1966171168
    %v1629 = vunpack.c.0.s8 %v1628
    %v1630 = vlaneseq
    %v1631 = vshrl.u32 %v1630, 7
    %v1632 = vsub.s32 %v1629, %v1631
    %v1633 = vrot.slane %v1623, %v1632
    %v1634 = vcombine.high %v1633, %v1633
    %v1636 = vunpack.c.l.s4 1966171168
    %v1637 = vunpack.c.0.s8 %v1636
    %v1638 = vlaneseq
    %v1639 = vshrl.u32 %v1638, 7
    %v1640 = vsub.s32 %v1637, %v1639
    %v1641 = vrot.slane %v1633, %v1640
    %v1643 = vunpack.c.l.s4 1966171168
    %v1644 = vunpack.c.0.s8 %v1643
    %v1645 = vlaneseq
    %v1646 = vshrl.u32 %v1645, 7
    %v1647 = vsub.s32 %v1644, %v1646
    %v1648 = vrot.slane %v1634, %v1647
    %v1649 = vlaneseq
    %v1650 = vshrl.u32 %v1649, 7
    %v1651 = vsub.s32 0, %v1650
    %v1652 = vrot.slane %v1641, %v1651
    %v1653 = vlaneseq
    %v1654 = vshrl.u32 %v1653, 7
    %v1655 = vsub.s32 0, %v1654
    %v1656 = vrot.slane %v1648, %v1655
    %v1659 = vmul.f32 %v1271, %v1652
    %v1660 = vmul.f32 %v1276, %v1652
    %v1661 = vmul.f32 %v1281, %v1656
    %v1662 = vmul.f32 %v1286, %v1656
    %v1663 = vadd.f32 %v1659, %v95
    %v1664 = vadd.f32 %v1660, %v96
    %v1665 = vadd.f32 %v1661, %v97
    %v1666 = vadd.f32 %v1662, %v98
    %v1667 = vadd.f32 %v1663, %v1664
    %v1668 = vadd.f32 %v1667, %v1665
    %v1669 = vadd.f32 %v1668, %v1666
    %v1670 = vrot.slane %v1669, 4
    %v1671 = vadd.f32 %v1669, %v1670
    %v1672 = vrot.slane %v1671, 2
    %v1673 = vadd.f32 %v1671, %v1672
    %v1674 = vrot.slane %v1673, 1
    %v1675 = vadd.f32 %v1673, %v1674
    %1676 = vmatprep.subr.mxu0 0.0
    %1677 = vmatpush1.msra.mxu0 %v123
    %1678 = vmatprep.subr.mxu0 0.0
    %1679 = vmatpush1.msra.mxu0 %v122
    %1680 = vmatprep.subr.mxu0 0.0
    %1681 = vmatpush1.msra.mxu0 %v121
    %1682 = vmatprep.subr.mxu0 0.0
    %1683 = vmatpush1.msra.mxu0 %v120
    %1684 = vmatprep.subr.mxu0 0.0
    %1685 = vmatpush1.msra.mxu0 %v119
    %1686 = vmatprep.subr.mxu0 0.0
    %1687 = vmatpush1.msra.mxu0 %v118
    %1688 = vmatprep.subr.mxu0 0.0
    %1689 = vmatpush1.msra.mxu0 %v117
    %1690 = vmatprep.subr.mxu0 0.0
    %1691 = vmatpush1.msra.mxu0 %v116
    %1692 = vmatprep.subr.mxu0 0.0
    %1693 = vmatpush1.msra.mxu0 %v115
    %1694 = vmatprep.subr.mxu0 0.0
    %1695 = vmatpush1.msra.mxu0 %v114
    %1696 = vmatprep.subr.mxu0 0.0
    %1697 = vmatpush1.msra.mxu0 %v113
    %1698 = vmatprep.subr.mxu0 0.0
    %1699 = vmatpush1.msra.mxu0 %v112
    %1700 = vmatprep.subr.mxu0 0.0
    %1701 = vmatpush1.msra.mxu0 %v111
    %1702 = vmatprep.subr.mxu0 0.0
    %1703 = vmatpush1.msra.mxu0 %v110
    %1704 = vmatprep.subr.mxu0 0.0
    %1705 = vmatpush1.msra.mxu0 %v109
    %1706 = vmatprep.subr.mxu0 0.0
    %1707 = vmatpush1.msra.mxu0 %v108
    %1708 = vmatprep.subr.mxu0 0.0
    %1709 = vmatpush2.msra.mxu0 0.0
    %1710 = vmatprep.subr.mxu0 0.0
    %1711 = vmatpush2.msra.mxu0 0.0
    %1712 = vmatprep.subr.mxu0 0.0
    %1713 = vmatpush2.msra.mxu0 0.0
    %1714 = vmatprep.subr.mxu0 0.0
    %1715 = vmatpush2.msra.mxu0 0.0
    %1716 = vmatprep.subr.mxu0 0.0
    %1717 = vmatpush2.msra.mxu0 0.0
    %1718 = vmatprep.subr.mxu0 0.0
    %1719 = vmatpush2.msra.mxu0 0.0
    %1720 = vmatprep.subr.mxu0 0.0
    %1721 = vmatpush2.msra.mxu0 0.0
    %1722 = vmatprep.subr.mxu0 0.0
    %1723 = vmatpush2.msra.mxu0 0.0
    %1724 = vmatprep.subr.mxu0 0.0
    %1725 = vmatpush2.msra.mxu0 0.0
    %1726 = vmatprep.subr.mxu0 0.0
    %1727 = vmatpush2.msra.mxu0 0.0
    %1728 = vmatprep.subr.mxu0 0.0
    %1729 = vmatpush2.msra.mxu0 0.0
    %1730 = vmatprep.subr.mxu0 0.0
    %1731 = vmatpush2.msra.mxu0 0.0
    %1732 = vmatprep.subr.mxu0 0.0
    %1733 = vmatpush2.msra.mxu0 0.0
    %1734 = vmatprep.subr.mxu0 0.0
    %1735 = vmatpush2.msra.mxu0 0.0
    %1736 = vmatprep.subr.mxu0 0.0
    %1737 = vmatpush2.msra.mxu0 0.0
    %1738 = vmatprep.subr.mxu0 0.0
    %1739 = vmatpush2.msra.mxu0 0.0
    %1740 = vmatprep.mubr.f32.mxu0 0.0
    %1741 = vmatmul.mubr.f32.gmra.mxu0 %v1675
    %v1742 = vpop.f32.mrf.mxu0
    %v1743 = vadd.f32 0.0, %v1742
    %v1744 = vpop.f32.mrf.mxu0
    %1745 = vdwg.mxu0
    %v1746 = vmul.f32 %v1663, %v1663
    %v1747 = vmul.f32 %v1664, %v1664
    %v1748 = vmul.f32 %v1665, %v1665
    %v1749 = vmul.f32 %v1666, %v1666
    %v1750 = vadd.f32 %v1746, %v1747
    %v1751 = vadd.f32 %v1750, %v1748
    %v1752 = vadd.f32 %v1751, %v1749
    %v1753 = vrot.slane %v1752, 4
    %v1754 = vadd.f32 %v1752, %v1753
    %v1755 = vrot.slane %v1754, 2
    %v1756 = vadd.f32 %v1754, %v1755
    %v1757 = vrot.slane %v1756, 1
    %v1758 = vadd.f32 %v1756, %v1757
    %1759 = vmatprep.subr.mxu0 0.0
    %1760 = vmatpush1.msra.mxu0 %v123
    %1761 = vmatprep.subr.mxu0 0.0
    %1762 = vmatpush1.msra.mxu0 %v122
    %1763 = vmatprep.subr.mxu0 0.0
    %1764 = vmatpush1.msra.mxu0 %v121
    %1765 = vmatprep.subr.mxu0 0.0
    %1766 = vmatpush1.msra.mxu0 %v120
    %1767 = vmatprep.subr.mxu0 0.0
    %1768 = vmatpush1.msra.mxu0 %v119
    %1769 = vmatprep.subr.mxu0 0.0
    %1770 = vmatpush1.msra.mxu0 %v118
    %1771 = vmatprep.subr.mxu0 0.0
    %1772 = vmatpush1.msra.mxu0 %v117
    %1773 = vmatprep.subr.mxu0 0.0
    %1774 = vmatpush1.msra.mxu0 %v116
    %1775 = vmatprep.subr.mxu0 0.0
    %1776 = vmatpush1.msra.mxu0 %v115
    %1777 = vmatprep.subr.mxu0 0.0
    %1778 = vmatpush1.msra.mxu0 %v114
    %1779 = vmatprep.subr.mxu0 0.0
    %1780 = vmatpush1.msra.mxu0 %v113
    %1781 = vmatprep.subr.mxu0 0.0
    %1782 = vmatpush1.msra.mxu0 %v112
    %1783 = vmatprep.subr.mxu0 0.0
    %1784 = vmatpush1.msra.mxu0 %v111
    %1785 = vmatprep.subr.mxu0 0.0
    %1786 = vmatpush1.msra.mxu0 %v110
    %1787 = vmatprep.subr.mxu0 0.0
    %1788 = vmatpush1.msra.mxu0 %v109
    %1789 = vmatprep.subr.mxu0 0.0
    %1790 = vmatpush1.msra.mxu0 %v108
    %1791 = vmatprep.subr.mxu0 0.0
    %1792 = vmatpush2.msra.mxu0 0.0
    %1793 = vmatprep.subr.mxu0 0.0
    %1794 = vmatpush2.msra.mxu0 0.0
    %1795 = vmatprep.subr.mxu0 0.0
    %1796 = vmatpush2.msra.mxu0 0.0
    %1797 = vmatprep.subr.mxu0 0.0
    %1798 = vmatpush2.msra.mxu0 0.0
    %1799 = vmatprep.subr.mxu0 0.0
    %1800 = vmatpush2.msra.mxu0 0.0
    %1801 = vmatprep.subr.mxu0 0.0
    %1802 = vmatpush2.msra.mxu0 0.0
    %1803 = vmatprep.subr.mxu0 0.0
    %1804 = vmatpush2.msra.mxu0 0.0
    %1805 = vmatprep.subr.mxu0 0.0
    %1806 = vmatpush2.msra.mxu0 0.0
    %1807 = vmatprep.subr.mxu0 0.0
    %1808 = vmatpush2.msra.mxu0 0.0
    %1809 = vmatprep.subr.mxu0 0.0
    %1810 = vmatpush2.msra.mxu0 0.0
    %1811 = vmatprep.subr.mxu0 0.0
    %1812 = vmatpush2.msra.mxu0 0.0
    %1813 = vmatprep.subr.mxu0 0.0
    %1814 = vmatpush2.msra.mxu0 0.0
    %1815 = vmatprep.subr.mxu0 0.0
    %1816 = vmatpush2.msra.mxu0 0.0
    %1817 = vmatprep.subr.mxu0 0.0
    %1818 = vmatpush2.msra.mxu0 0.0
    %1819 = vmatprep.subr.mxu0 0.0
    %1820 = vmatpush2.msra.mxu0 0.0
    %1821 = vmatprep.subr.mxu0 0.0
    %1822 = vmatpush2.msra.mxu0 0.0
    %1823 = vmatprep.mubr.f32.mxu0 0.0
    %1824 = vmatmul.mubr.f32.gmra.mxu0 %v1758
    %v1825 = vpop.f32.mrf.mxu0
    %v1826 = vadd.f32 0.0, %v1825
    %v1827 = vpop.f32.mrf.mxu0
    %1828 = vdwg.mxu0
    %v1829 = vmul.f32 %v1743, 0.001953125
    %v1830 = vmul.f32 %v1826, 0.001953125
    %v1831 = vmul.f32 %v1829, %v1829
    %v1832 = vsub.f32 %v1830, %v1831
    %v1833 = vld [vmem:[%s8] sm:$0x1]
    %v1834 = vadd.f32 %v1832, 1e-05
    %v1835 = vrsqrt.pop %v1834
    %v1836 = vmul.f32 %v1833, %v1835
    %v1837 = vld [vmem:[%s9] sm:$0x1]
    %v1838 = vmul.f32 %v1829, %v1836
    %v1839 = vsub.f32 %v1837, %v1838
    %v1841 = vsel %vm289, %v1836, 0
    %1843 = vmatprep.subr.mxu0 0.0
    %1844 = vmatpush1.msra.mxu0 0.0
    %1845 = vmatprep.subr.mxu0 0.0
    %1846 = vmatpush1.msra.mxu0 0.0
    %1847 = vmatprep.subr.mxu0 0.0
    %1848 = vmatpush1.msra.mxu0 0.0
    %1849 = vmatprep.subr.mxu0 0.0
    %1850 = vmatpush1.msra.mxu0 0.0
    %1851 = vmatprep.subr.mxu0 0.0
    %1852 = vmatpush1.msra.mxu0 0.0
    %1853 = vmatprep.subr.mxu0 0.0
    %1854 = vmatpush1.msra.mxu0 0.0
    %1855 = vmatprep.subr.mxu0 0.0
    %1856 = vmatpush1.msra.mxu0 0.0
    %1857 = vmatprep.subr.mxu0 0.0
    %1858 = vmatpush1.msra.mxu0 0.0
    %1859 = vmatprep.subr.mxu0 0.0
    %1860 = vmatpush1.msra.mxu0 0.0
    %1861 = vmatprep.subr.mxu0 0.0
    %1862 = vmatpush1.msra.mxu0 0.0
    %1863 = vmatprep.subr.mxu0 0.0
    %1864 = vmatpush1.msra.mxu0 0.0
    %1865 = vmatprep.subr.mxu0 0.0
    %1866 = vmatpush1.msra.mxu0 0.0
    %1867 = vmatprep.subr.mxu0 0.0
    %1868 = vmatpush1.msra.mxu0 0.0
    %1869 = vmatprep.subr.mxu0 0.0
    %1870 = vmatpush1.msra.mxu0 0.0
    %1871 = vmatprep.subr.mxu0 0.0
    %1872 = vmatpush1.msra.mxu0 0.0
    %1873 = vmatprep.subr.mxu0 0.0
    %1874 = vmatpush1.msra.mxu0 %v288
    %1875 = vmatprep.subr.mxu0 0.0
    %1876 = vmatpush2.msra.mxu0 0.0
    %1877 = vmatprep.subr.mxu0 0.0
    %1878 = vmatpush2.msra.mxu0 0.0
    %1879 = vmatprep.subr.mxu0 0.0
    %1880 = vmatpush2.msra.mxu0 0.0
    %1881 = vmatprep.subr.mxu0 0.0
    %1882 = vmatpush2.msra.mxu0 0.0
    %1883 = vmatprep.subr.mxu0 0.0
    %1884 = vmatpush2.msra.mxu0 0.0
    %1885 = vmatprep.subr.mxu0 0.0
    %1886 = vmatpush2.msra.mxu0 0.0
    %1887 = vmatprep.subr.mxu0 0.0
    %1888 = vmatpush2.msra.mxu0 0.0
    %1889 = vmatprep.subr.mxu0 0.0
    %1890 = vmatpush2.msra.mxu0 0.0
    %1891 = vmatprep.subr.mxu0 0.0
    %1892 = vmatpush2.msra.mxu0 0.0
    %1893 = vmatprep.subr.mxu0 0.0
    %1894 = vmatpush2.msra.mxu0 0.0
    %1895 = vmatprep.subr.mxu0 0.0
    %1896 = vmatpush2.msra.mxu0 0.0
    %1897 = vmatprep.subr.mxu0 0.0
    %1898 = vmatpush2.msra.mxu0 0.0
    %1899 = vmatprep.subr.mxu0 0.0
    %1900 = vmatpush2.msra.mxu0 0.0
    %1901 = vmatprep.subr.mxu0 0.0
    %1902 = vmatpush2.msra.mxu0 0.0
    %1903 = vmatprep.subr.mxu0 0.0
    %1904 = vmatpush2.msra.mxu0 0.0
    %1905 = vmatprep.subr.mxu0 0.0
    %1906 = vmatpush2.msra.mxu0 0.0
    %1907 = vmatprep.mubr.f32.mxu0 0.0
    %1908 = vmatmul.mubr.f32.gmra.mxu0 %v1841
    %v1909 = vpop.f32.mrf.mxu0
    %v1910 = vadd.f32 0.0, %v1909
    %v1911 = vpop.f32.mrf.mxu0
    %1912 = vdwg.mxu0
    %v1914 = vsel %vm289, %v1839, 0
    %1916 = vmatprep.subr.mxu0 0.0
    %1917 = vmatpush1.msra.mxu0 0.0
    %1918 = vmatprep.subr.mxu0 0.0
    %1919 = vmatpush1.msra.mxu0 0.0
    %1920 = vmatprep.subr.mxu0 0.0
    %1921 = vmatpush1.msra.mxu0 0.0
    %1922 = vmatprep.subr.mxu0 0.0
    %1923 = vmatpush1.msra.mxu0 0.0
    %1924 = vmatprep.subr.mxu0 0.0
    %1925 = vmatpush1.msra.mxu0 0.0
    %1926 = vmatprep.subr.mxu0 0.0
    %1927 = vmatpush1.msra.mxu0 0.0
    %1928 = vmatprep.subr.mxu0 0.0
    %1929 = vmatpush1.msra.mxu0 0.0
    %1930 = vmatprep.subr.mxu0 0.0
    %1931 = vmatpush1.msra.mxu0 0.0
    %1932 = vmatprep.subr.mxu0 0.0
    %1933 = vmatpush1.msra.mxu0 0.0
    %1934 = vmatprep.subr.mxu0 0.0
    %1935 = vmatpush1.msra.mxu0 0.0
    %1936 = vmatprep.subr.mxu0 0.0
    %1937 = vmatpush1.msra.mxu0 0.0
    %1938 = vmatprep.subr.mxu0 0.0
    %1939 = vmatpush1.msra.mxu0 0.0
    %1940 = vmatprep.subr.mxu0 0.0
    %1941 = vmatpush1.msra.mxu0 0.0
    %1942 = vmatprep.subr.mxu0 0.0
    %1943 = vmatpush1.msra.mxu0 0.0
    %1944 = vmatprep.subr.mxu0 0.0
    %1945 = vmatpush1.msra.mxu0 0.0
    %1946 = vmatprep.subr.mxu0 0.0
    %1947 = vmatpush1.msra.mxu0 %v288
    %1948 = vmatprep.subr.mxu0 0.0
    %1949 = vmatpush2.msra.mxu0 0.0
    %1950 = vmatprep.subr.mxu0 0.0
    %1951 = vmatpush2.msra.mxu0 0.0
    %1952 = vmatprep.subr.mxu0 0.0
    %1953 = vmatpush2.msra.mxu0 0.0
    %1954 = vmatprep.subr.mxu0 0.0
    %1955 = vmatpush2.msra.mxu0 0.0
    %1956 = vmatprep.subr.mxu0 0.0
    %1957 = vmatpush2.msra.mxu0 0.0
    %1958 = vmatprep.subr.mxu0 0.0
    %1959 = vmatpush2.msra.mxu0 0.0
    %1960 = vmatprep.subr.mxu0 0.0
    %1961 = vmatpush2.msra.mxu0 0.0
    %1962 = vmatprep.subr.mxu0 0.0
    %1963 = vmatpush2.msra.mxu0 0.0
    %1964 = vmatprep.subr.mxu0 0.0
    %1965 = vmatpush2.msra.mxu0 0.0
    %1966 = vmatprep.subr.mxu0 0.0
    %1967 = vmatpush2.msra.mxu0 0.0
    %1968 = vmatprep.subr.mxu0 0.0
    %1969 = vmatpush2.msra.mxu0 0.0
    %1970 = vmatprep.subr.mxu0 0.0
    %1971 = vmatpush2.msra.mxu0 0.0
    %1972 = vmatprep.subr.mxu0 0.0
    %1973 = vmatpush2.msra.mxu0 0.0
    %1974 = vmatprep.subr.mxu0 0.0
    %1975 = vmatpush2.msra.mxu0 0.0
    %1976 = vmatprep.subr.mxu0 0.0
    %1977 = vmatpush2.msra.mxu0 0.0
    %1978 = vmatprep.subr.mxu0 0.0
    %1979 = vmatpush2.msra.mxu0 0.0
    %1980 = vmatprep.mubr.f32.mxu0 0.0
    %1981 = vmatmul.mubr.f32.gmra.mxu0 %v1914
    %v1982 = vpop.f32.mrf.mxu0
    %v1983 = vadd.f32 0.0, %v1982
    %v1984 = vpop.f32.mrf.mxu0
    %1985 = vdwg.mxu0
    %v1986 = vlaneseq
    %v1987 = vshrl.u32 %v1986, 7
    %v1988 = vsub.s32 0, %v1987
    %v1989 = vrot.slane %v1910, %v1988
    %v1990 = vmul.f32 %v1663, %v1989
    %v1991 = vmul.f32 %v1664, %v1989
    %v1992 = vmul.f32 %v1665, %v1989
    %v1993 = vmul.f32 %v1666, %v1989
    %v1994 = vlaneseq
    %v1995 = vshrl.u32 %v1994, 7
    %v1996 = vsub.s32 0, %v1995
    %v1997 = vrot.slane %v1983, %v1996
    %v1998 = vadd.f32 %v1990, %v1997
    %v1999 = vadd.f32 %v1991, %v1997
    %v2000 = vadd.f32 %v1992, %v1997
    %v2001 = vadd.f32 %v1993, %v1997
    %v2002 = vmax.f32 %v1998, 0.0
    %v2003 = vmax.f32 %v1999, 0.0
    %v2004 = vmax.f32 %v2000, 0.0
    %v2005 = vmax.f32 %v2001, 0.0
    %v2006 = vld [vmem:[#allocation7] sm:$0xff]
    %v2007 = vld [vmem:[#allocation7 + $0x8] sm:$0xff]
    %v2008 = vld [vmem:[#allocation7 + $0x10] sm:$0xff]
    %v2009 = vld [vmem:[#allocation7 + $0x18] sm:$0xff]
    %v2010 = vld [vmem:[#allocation7 + $0x20] sm:$0xff]
    %v2011 = vld [vmem:[#allocation7 + $0x28] sm:$0xff]
    %v2012 = vld [vmem:[#allocation7 + $0x30] sm:$0xff]
    %v2013 = vld [vmem:[#allocation7 + $0x38] sm:$0xff]
    %v2014 = vld [vmem:[#allocation7 + $0x40] sm:$0xff]
    %v2015 = vld [vmem:[#allocation7 + $0x48] sm:$0xff]
    %v2016 = vld [vmem:[#allocation7 + $0x50] sm:$0xff]
    %v2017 = vld [vmem:[#allocation7 + $0x58] sm:$0xff]
    %v2018 = vld [vmem:[#allocation7 + $0x60] sm:$0xff]
    %v2019 = vld [vmem:[#allocation7 + $0x68] sm:$0xff]
    %v2020 = vld [vmem:[#allocation7 + $0x70] sm:$0xff]
    %v2021 = vld [vmem:[#allocation7 + $0x78] sm:$0xff]
    %v2022 = vld [vmem:[#allocation7 + $0x80] sm:$0xff]
    %v2023 = vld [vmem:[#allocation7 + $0x88] sm:$0xff]
    %v2024 = vld [vmem:[#allocation7 + $0x90] sm:$0xff]
    %v2025 = vld [vmem:[#allocation7 + $0x98] sm:$0xff]
    %v2026 = vld [vmem:[#allocation7 + $0xa0] sm:$0xff]
    %v2027 = vld [vmem:[#allocation7 + $0xa8] sm:$0xff]
    %v2028 = vld [vmem:[#allocation7 + $0xb0] sm:$0xff]
    %v2029 = vld [vmem:[#allocation7 + $0xb8] sm:$0xff]
    %v2030 = vld [vmem:[#allocation7 + $0xc0] sm:$0xff]
    %v2031 = vld [vmem:[#allocation7 + $0xc8] sm:$0xff]
    %v2032 = vld [vmem:[#allocation7 + $0xd0] sm:$0xff]
    %v2033 = vld [vmem:[#allocation7 + $0xd8] sm:$0xff]
    %v2034 = vld [vmem:[#allocation7 + $0xe0] sm:$0xff]
    %v2035 = vld [vmem:[#allocation7 + $0xe8] sm:$0xff]
    %v2036 = vld [vmem:[#allocation7 + $0xf0] sm:$0xff]
    %v2037 = vld [vmem:[#allocation7 + $0xf8] sm:$0xff]
    %v2038 = vld [vmem:[#allocation7 + $0x100] sm:$0xff]
    %v2039 = vld [vmem:[#allocation7 + $0x108] sm:$0xff]
    %v2040 = vld [vmem:[#allocation7 + $0x110] sm:$0xff]
    %v2041 = vld [vmem:[#allocation7 + $0x118] sm:$0xff]
    %v2042 = vld [vmem:[#allocation7 + $0x120] sm:$0xff]
    %v2043 = vld [vmem:[#allocation7 + $0x128] sm:$0xff]
    %v2044 = vld [vmem:[#allocation7 + $0x130] sm:$0xff]
    %v2045 = vld [vmem:[#allocation7 + $0x138] sm:$0xff]
    %v2046 = vld [vmem:[#allocation7 + $0x140] sm:$0xff]
    %v2047 = vld [vmem:[#allocation7 + $0x148] sm:$0xff]
    %v2048 = vld [vmem:[#allocation7 + $0x150] sm:$0xff]
    %v2049 = vld [vmem:[#allocation7 + $0x158] sm:$0xff]
    %v2050 = vld [vmem:[#allocation7 + $0x160] sm:$0xff]
    %v2051 = vld [vmem:[#allocation7 + $0x168] sm:$0xff]
    %v2052 = vld [vmem:[#allocation7 + $0x170] sm:$0xff]
    %v2053 = vld [vmem:[#allocation7 + $0x178] sm:$0xff]
    %v2054 = vld [vmem:[#allocation7 + $0x180] sm:$0xff]
    %v2055 = vld [vmem:[#allocation7 + $0x188] sm:$0xff]
    %v2056 = vld [vmem:[#allocation7 + $0x190] sm:$0xff]
    %v2057 = vld [vmem:[#allocation7 + $0x198] sm:$0xff]
    %v2058 = vld [vmem:[#allocation7 + $0x1a0] sm:$0xff]
    %v2059 = vld [vmem:[#allocation7 + $0x1a8] sm:$0xff]
    %v2060 = vld [vmem:[#allocation7 + $0x1b0] sm:$0xff]
    %v2061 = vld [vmem:[#allocation7 + $0x1b8] sm:$0xff]
    %v2062 = vld [vmem:[#allocation7 + $0x1c0] sm:$0xff]
    %v2063 = vld [vmem:[#allocation7 + $0x1c8] sm:$0xff]
    %v2064 = vld [vmem:[#allocation7 + $0x1d0] sm:$0xff]
    %v2065 = vld [vmem:[#allocation7 + $0x1d8] sm:$0xff]
    %v2066 = vld [vmem:[#allocation7 + $0x1e0] sm:$0xff]
    %v2067 = vld [vmem:[#allocation7 + $0x1e8] sm:$0xff]
    %v2068 = vld [vmem:[#allocation7 + $0x1f0] sm:$0xff]
    %v2069 = vld [vmem:[#allocation7 + $0x1f8] sm:$0xff]
    %2070 = vmatprep.subr.mxu0 %v2067
    %2071 = vmatpush1.msra.mxu0 %v2066
    %2072 = vmatprep.subr.mxu0 %v2063
    %2073 = vmatpush1.msra.mxu0 %v2062
    %2074 = vmatprep.subr.mxu0 %v2059
    %2075 = vmatpush1.msra.mxu0 %v2058
    %2076 = vmatprep.subr.mxu0 %v2055
    %2077 = vmatpush1.msra.mxu0 %v2054
    %2078 = vmatprep.subr.mxu0 %v2051
    %2079 = vmatpush1.msra.mxu0 %v2050
    %2080 = vmatprep.subr.mxu0 %v2047
    %2081 = vmatpush1.msra.mxu0 %v2046
    %2082 = vmatprep.subr.mxu0 %v2043
    %2083 = vmatpush1.msra.mxu0 %v2042
    %2084 = vmatprep.subr.mxu0 %v2039
    %2085 = vmatpush1.msra.mxu0 %v2038
    %2086 = vmatprep.subr.mxu0 %v2035
    %2087 = vmatpush1.msra.mxu0 %v2034
    %2088 = vmatprep.subr.mxu0 %v2031
    %2089 = vmatpush1.msra.mxu0 %v2030
    %2090 = vmatprep.subr.mxu0 %v2027
    %2091 = vmatpush1.msra.mxu0 %v2026
    %2092 = vmatprep.subr.mxu0 %v2023
    %2093 = vmatpush1.msra.mxu0 %v2022
    %2094 = vmatprep.subr.mxu0 %v2019
    %2095 = vmatpush1.msra.mxu0 %v2018
    %2096 = vmatprep.subr.mxu0 %v2015
    %2097 = vmatpush1.msra.mxu0 %v2014
    %2098 = vmatprep.subr.mxu0 %v2011
    %2099 = vmatpush1.msra.mxu0 %v2010
    %2100 = vmatprep.subr.mxu0 %v2007
    %2101 = vmatpush1.msra.mxu0 %v2006
    %2102 = vmatprep.subr.mxu0 0.0
    %2103 = vmatpush2.msra.mxu0 0.0
    %2104 = vmatprep.subr.mxu0 0.0
    %2105 = vmatpush2.msra.mxu0 0.0
    %2106 = vmatprep.subr.mxu0 0.0
    %2107 = vmatpush2.msra.mxu0 0.0
    %2108 = vmatprep.subr.mxu0 0.0
    %2109 = vmatpush2.msra.mxu0 0.0
    %2110 = vmatprep.subr.mxu0 0.0
    %2111 = vmatpush2.msra.mxu0 0.0
    %2112 = vmatprep.subr.mxu0 0.0
    %2113 = vmatpush2.msra.mxu0 0.0
    %2114 = vmatprep.subr.mxu0 0.0
    %2115 = vmatpush2.msra.mxu0 0.0
    %2116 = vmatprep.subr.mxu0 0.0
    %2117 = vmatpush2.msra.mxu0 0.0
    %2118 = vmatprep.subr.mxu0 0.0
    %2119 = vmatpush2.msra.mxu0 0.0
    %2120 = vmatprep.subr.mxu0 0.0
    %2121 = vmatpush2.msra.mxu0 0.0
    %2122 = vmatprep.subr.mxu0 0.0
    %2123 = vmatpush2.msra.mxu0 0.0
    %2124 = vmatprep.subr.mxu0 0.0
    %2125 = vmatpush2.msra.mxu0 0.0
    %2126 = vmatprep.subr.mxu0 0.0
    %2127 = vmatpush2.msra.mxu0 0.0
    %2128 = vmatprep.subr.mxu0 0.0
    %2129 = vmatpush2.msra.mxu0 0.0
    %2130 = vmatprep.subr.mxu0 0.0
    %2131 = vmatpush2.msra.mxu0 0.0
    %2132 = vmatprep.subr.mxu0 0.0
    %2133 = vmatpush2.msra.mxu0 0.0
    %2134 = vmatprep.mubr.f32.mxu0 0.0
    %2135 = vmatmul.mubr.f32.gmra.mxu0 %v2002
    %v2136 = vpop.f32.mrf.mxu0
    %v2137 = vadd.f32 0.0, %v2136
    %v2138 = vpop.f32.mrf.mxu0
    %v2139 = vadd.f32 0.0, %v2138
    %2140 = vmatprep.mubr.f32.mxu0 0.0
    %2141 = vmatmul.mubr.f32.gmra.mxu0 %v2003
    %v2142 = vpop.f32.mrf.mxu0
    %v2143 = vadd.f32 0.0, %v2142
    %v2144 = vpop.f32.mrf.mxu0
    %v2145 = vadd.f32 0.0, %v2144
    %2146 = vmatprep.mubr.f32.mxu0 0.0
    %2147 = vmatmul.mubr.f32.gmra.mxu0 %v2004
    %v2148 = vpop.f32.mrf.mxu0
    %v2149 = vadd.f32 0.0, %v2148
    %v2150 = vpop.f32.mrf.mxu0
    %v2151 = vadd.f32 0.0, %v2150
    %2152 = vmatprep.mubr.f32.mxu0 0.0
    %2153 = vmatmul.mubr.f32.gmra.mxu0 %v2005
    %v2154 = vpop.f32.mrf.mxu0
    %v2155 = vadd.f32 0.0, %v2154
    %v2156 = vpop.f32.mrf.mxu0
    %v2157 = vadd.f32 0.0, %v2156
    %2158 = vdwg.mxu0
    %2159 = vmatprep.subr.mxu0 %v2069
    %2160 = vmatpush1.msra.mxu0 %v2068
    %2161 = vmatprep.subr.mxu0 %v2065
    %2162 = vmatpush1.msra.mxu0 %v2064
    %2163 = vmatprep.subr.mxu0 %v2061
    %2164 = vmatpush1.msra.mxu0 %v2060
    %2165 = vmatprep.subr.mxu0 %v2057
    %2166 = vmatpush1.msra.mxu0 %v2056
    %2167 = vmatprep.subr.mxu0 %v2053
    %2168 = vmatpush1.msra.mxu0 %v2052
    %2169 = vmatprep.subr.mxu0 %v2049
    %2170 = vmatpush1.msra.mxu0 %v2048
    %2171 = vmatprep.subr.mxu0 %v2045
    %2172 = vmatpush1.msra.mxu0 %v2044
    %2173 = vmatprep.subr.mxu0 %v2041
    %2174 = vmatpush1.msra.mxu0 %v2040
    %2175 = vmatprep.subr.mxu0 %v2037
    %2176 = vmatpush1.msra.mxu0 %v2036
    %2177 = vmatprep.subr.mxu0 %v2033
    %2178 = vmatpush1.msra.mxu0 %v2032
    %2179 = vmatprep.subr.mxu0 %v2029
    %2180 = vmatpush1.msra.mxu0 %v2028
    %2181 = vmatprep.subr.mxu0 %v2025
    %2182 = vmatpush1.msra.mxu0 %v2024
    %2183 = vmatprep.subr.mxu0 %v2021
    %2184 = vmatpush1.msra.mxu0 %v2020
    %2185 = vmatprep.subr.mxu0 %v2017
    %2186 = vmatpush1.msra.mxu0 %v2016
    %2187 = vmatprep.subr.mxu0 %v2013
    %2188 = vmatpush1.msra.mxu0 %v2012
    %2189 = vmatprep.subr.mxu0 %v2009
    %2190 = vmatpush1.msra.mxu0 %v2008
    %2191 = vmatprep.subr.mxu0 0.0
    %2192 = vmatpush2.msra.mxu0 0.0
    %2193 = vmatprep.subr.mxu0 0.0
    %2194 = vmatpush2.msra.mxu0 0.0
    %2195 = vmatprep.subr.mxu0 0.0
    %2196 = vmatpush2.msra.mxu0 0.0
    %2197 = vmatprep.subr.mxu0 0.0
    %2198 = vmatpush2.msra.mxu0 0.0
    %2199 = vmatprep.subr.mxu0 0.0
    %2200 = vmatpush2.msra.mxu0 0.0
    %2201 = vmatprep.subr.mxu0 0.0
    %2202 = vmatpush2.msra.mxu0 0.0
    %2203 = vmatprep.subr.mxu0 0.0
    %2204 = vmatpush2.msra.mxu0 0.0
    %2205 = vmatprep.subr.mxu0 0.0
    %2206 = vmatpush2.msra.mxu0 0.0
    %2207 = vmatprep.subr.mxu0 0.0
    %2208 = vmatpush2.msra.mxu0 0.0
    %2209 = vmatprep.subr.mxu0 0.0
    %2210 = vmatpush2.msra.mxu0 0.0
    %2211 = vmatprep.subr.mxu0 0.0
    %2212 = vmatpush2.msra.mxu0 0.0
    %2213 = vmatprep.subr.mxu0 0.0
    %2214 = vmatpush2.msra.mxu0 0.0
    %2215 = vmatprep.subr.mxu0 0.0
    %2216 = vmatpush2.msra.mxu0 0.0
    %2217 = vmatprep.subr.mxu0 0.0
    %2218 = vmatpush2.msra.mxu0 0.0
    %2219 = vmatprep.subr.mxu0 0.0
    %2220 = vmatpush2.msra.mxu0 0.0
    %2221 = vmatprep.subr.mxu0 0.0
    %2222 = vmatpush2.msra.mxu0 0.0
    %2223 = vmatprep.mubr.f32.mxu0 0.0
    %2224 = vmatmul.mubr.f32.gmra.mxu0 %v2002
    %v2225 = vpop.f32.mrf.mxu0
    %v2226 = vadd.f32 0.0, %v2225
    %v2227 = vpop.f32.mrf.mxu0
    %v2228 = vadd.f32 0.0, %v2227
    %2229 = vmatprep.mubr.f32.mxu0 0.0
    %2230 = vmatmul.mubr.f32.gmra.mxu0 %v2003
    %v2231 = vpop.f32.mrf.mxu0
    %v2232 = vadd.f32 0.0, %v2231
    %v2233 = vpop.f32.mrf.mxu0
    %v2234 = vadd.f32 0.0, %v2233
    %2235 = vmatprep.mubr.f32.mxu0 0.0
    %2236 = vmatmul.mubr.f32.gmra.mxu0 %v2004
    %v2237 = vpop.f32.mrf.mxu0
    %v2238 = vadd.f32 0.0, %v2237
    %v2239 = vpop.f32.mrf.mxu0
    %v2240 = vadd.f32 0.0, %v2239
    %2241 = vmatprep.mubr.f32.mxu0 0.0
    %2242 = vmatmul.mubr.f32.gmra.mxu0 %v2005
    %v2243 = vpop.f32.mrf.mxu0
    %v2244 = vadd.f32 0.0, %v2243
    %v2245 = vpop.f32.mrf.mxu0
    %v2246 = vadd.f32 0.0, %v2245
    %2247 = vdwg.mxu0
    %2248 = vst [vmem:[#allocation8] sm:$0xff] %v2137
    %2249 = vst [vmem:[#allocation8 + $0x8] sm:$0xff] %v2139
    %2250 = vst [vmem:[#allocation8 + $0x10] sm:$0xff] %v2226
    %2251 = vst [vmem:[#allocation8 + $0x18] sm:$0xff] %v2228
    %2252 = vst [vmem:[#allocation8 + $0x20] sm:$0xff] %v2143
    %2253 = vst [vmem:[#allocation8 + $0x28] sm:$0xff] %v2145
    %2254 = vst [vmem:[#allocation8 + $0x30] sm:$0xff] %v2232
    %2255 = vst [vmem:[#allocation8 + $0x38] sm:$0xff] %v2234
    %2256 = vst [vmem:[#allocation8 + $0x40] sm:$0xff] %v2149
    %2257 = vst [vmem:[#allocation8 + $0x48] sm:$0xff] %v2151
    %2258 = vst [vmem:[#allocation8 + $0x50] sm:$0xff] %v2238
    %2259 = vst [vmem:[#allocation8 + $0x58] sm:$0xff] %v2240
    %2260 = vst [vmem:[#allocation8 + $0x60] sm:$0xff] %v2155
    %2261 = vst [vmem:[#allocation8 + $0x68] sm:$0xff] %v2157
    %2262 = vst [vmem:[#allocation8 + $0x70] sm:$0xff] %v2244
    %2263 = vst [vmem:[#allocation8 + $0x78] sm:$0xff] %v2246
    // Predicated region
    $region78: #{tpu_custom_call.1} parent=1 // pred_check
      _
    $region79: #{tpu_custom_call.1} parent=1 // pred_check_branch
      %2265 = sbr.rel (0) target = $region81
    $region80: #{tpu_custom_call.1} parent=1 // pred_region
      %s2267 = ssub.s32 2048, 2048
      %2268 = vsyncadd [#allocation4], %s2267
      %s2269 = sshll.u32 [#allocation8], 4
      %s2270 = int_to_ptr.vmem [resolvable:$true] %s2269
      %2275 = dma.vmem_to_hbm [thread:$0]  %s2270, 2048, %s16, [#allocation4], 512, 512, 32
    $region81: #{tpu_custom_call.1} parent=1 // pred_fallthru
      _
    // Predicated region
    $region82: #{tpu_custom_call.1} parent=1 // pred_check
      _
    $region83: #{tpu_custom_call.1} parent=1 // pred_check_branch
      %2277 = sbr.rel (0) target = $region85
    $region84: #{tpu_custom_call.1} parent=1 // pred_region
      %2278 = dma.done [#allocation4], 2048
    $region85: #{tpu_custom_call.1} parent=1 // pred_fallthru
      _
    %2279 = vsyncpa [#allocation3], 1
    %2280 = vsyncpa [#allocation6], 1
    %2281 = vsyncpa [#allocation4], 1

</llo_original>
